<compile_context>
chip_gen: v5e
topology: v5e:2x2
jax: 0.10.0
libtpu: 0.0.40
codegen_flags: <defaults>
</compile_context>

<pallas_src>
import functools

import jax
import jax.numpy as jnp
from jax.experimental import pallas as pl
from jax.experimental.pallas import tpu as pltpu


HIDDEN = 256

# Row layout of the packed `vec` array ([19, HIDDEN] f32):
#   rows 0..8   : q1 head  (b1, g1, be1, b2, g2, be2, b3, g3, be3)
#   rows 9..17  : q2 head  (same order)
#   row  18     : final biases at lanes [0]=bf_q1, [1]=bf_q2
_B1, _G1, _BE1, _B2, _G2, _BE2, _B3, _G3, _BE3 = range(9)
_ROWS_PER_HEAD = 9
_BF_ROW = 2 * _ROWS_PER_HEAD
_VEC_ROWS = _BF_ROW + 1


def _mish(z):
    """mish(z) = z * tanh(softplus(z)), cheap + overflow-free.

    With e = exp(-|z|):
        z >= 0: tanh(softplus(z)) = (1 + 2e)   / (1 + 2e + 2e^2)
        z <  0: tanh(softplus(z)) = (2e + e^2) / (2 + 2e + e^2)
    -> one EUP exp + one approx reciprocal (den >= 1 so approx is safe).
    """
    e = jnp.exp(-jnp.abs(z))
    e2 = e * e
    pos = z >= 0.0
    num = jnp.where(pos, 1.0 + 2.0 * e, 2.0 * e + e2)
    den = jnp.where(pos, 1.0 + 2.0 * e + 2.0 * e2, 2.0 + 2.0 * e + e2)
    return z * num * pl.reciprocal(den, approx=True)


def _layernorm(h, gamma, beta, eps=1e-5):
    mean = jnp.mean(h, axis=-1, keepdims=True)
    c = h - mean
    var = jnp.mean(c * c, axis=-1, keepdims=True)
    return c * jax.lax.rsqrt(var + eps) * gamma + beta


def critic_kernel(use_layernorm, state_ref, action_ref,
                  w1s_ref, w1a_ref, w2_ref, w3_ref, wf_ref, vec_ref, out_ref):
    H = w2_ref.shape[-1]

    s = state_ref[...].astype(jnp.bfloat16)
    a = action_ref[...].astype(jnp.bfloat16)
    vec = vec_ref[...]                                   # [19, H] f32, one load

    # ---- Layer 1, fused across both heads: [B, 2H] (no cat([state, action])) ----
    h12 = (jnp.dot(s, w1s_ref[...], preferred_element_type=jnp.float32)
           + jnp.dot(a, w1a_ref[...], preferred_element_type=jnp.float32))

    def q_head(h1, base, w2, w3):
        def v(row):                                      # [1, H] f32 static row slice
            return vec[base + row:base + row + 1, :]

        h = h1 + v(_B1)
        if use_layernorm:
            h = _layernorm(h, v(_G1), v(_BE1))
        h = _mish(h)

        h = jnp.dot(h.astype(jnp.bfloat16), w2,
                    preferred_element_type=jnp.float32) + v(_B2)
        if use_layernorm:
            h = _layernorm(h, v(_G2), v(_BE2))
        h = _mish(h)

        h = jnp.dot(h.astype(jnp.bfloat16), w3,
                    preferred_element_type=jnp.float32) + v(_B3)
        if use_layernorm:
            h = _layernorm(h, v(_G3), v(_BE3))
        h = _mish(h)

        # Final projection against the stacked [H, 2] wf; the relevant column is
        # column 0 for head 0 and column 1 for head 1 (selected below).
        return jnp.dot(h.astype(jnp.bfloat16), wf_ref[...],
                       preferred_element_type=jnp.float32)        # [B, 2]

    qa = q_head(h12[:, :H], 0, w2_ref[0], w3_ref[0])               # col 0 valid
    qb = q_head(h12[:, H:], _ROWS_PER_HEAD, w2_ref[1], w3_ref[1])  # col 1 valid

    bf = vec[_BF_ROW:_BF_ROW + 1, 0:2]                             # [1, 2] final biases
    lane = jax.lax.broadcasted_iota(jnp.int32, qa.shape, 1)
    # VPU lane-select merge (no cross-lane concat), single store of the [B,2] slab.
    out_ref[...] = (jnp.where(lane == 0, qa, qb) + bf).astype(out_ref.dtype)


def critic_forward(state, action, kernel_params, *, use_layernorm):
    """state: [B, state_dim], action: [B, action_dim] -> (q1 [B,1], q2 [B,1])."""
    B = state.shape[0]
    vmem = pl.BlockSpec(memory_space=pltpu.MemorySpace.VMEM)
    args = (state, action,
            kernel_params["w1s"], kernel_params["w1a"],
            kernel_params["w2"], kernel_params["w3"],
            kernel_params["wf"], kernel_params["vec"])
    out = pl.pallas_call(
        functools.partial(critic_kernel, use_layernorm),
        out_shape=jax.ShapeDtypeStruct((B, 2), jnp.float32),
        in_specs=[vmem] * len(args),
        out_specs=vmem,
    )(*args)
    return out[:, 0:1], out[:, 1:2]


def make_params(key, state_dim, action_dim, hidden_dim=HIDDEN):
    """f32 master parameters matching the nn.Module shapes.

    Weights are [in_features, out_features] (y = x @ W + b, i.e. W = torch_weight.T);
    the first-layer weight is pre-split into state/action slices.
    """
    def head(k):
        ks = jax.random.split(k, 14)

        def w(kk, shape, scale=0.05):
            return (scale * jax.random.normal(kk, shape)).astype(jnp.float32)

        return {
            "w1s": w(ks[0], (state_dim, hidden_dim)),
            "w1a": w(ks[1], (action_dim, hidden_dim)),
            "b1":  w(ks[2], (1, hidden_dim)),
            "g1":  1.0 + w(ks[3], (1, hidden_dim), 0.1),
            "be1": w(ks[4], (1, hidden_dim)),
            "w2":  w(ks[5], (hidden_dim, hidden_dim)),
            "b2":  w(ks[6], (1, hidden_dim)),
            "g2":  1.0 + w(ks[7], (1, hidden_dim), 0.1),
            "be2": w(ks[8], (1, hidden_dim)),
            "w3":  w(ks[9], (hidden_dim, hidden_dim)),
            "b3":  w(ks[10], (1, hidden_dim)),
            "g3":  1.0 + w(ks[11], (1, hidden_dim), 0.1),
            "be3": w(ks[12], (1, hidden_dim)),
            "wf":  w(ks[13], (hidden_dim, 1)),
            "bf":  jnp.zeros((1, 1), jnp.float32),
        }

    k1, k2 = jax.random.split(key)
    return {"q1": head(k1), "q2": head(k2)}


def to_kernel_params(params):
    """Pack the per-head parameter dicts into the few arrays the kernel wants.

    Weight matrices -> bf16 (halves HBM weight DMA, MXU-native); all [1,H] vectors
    (biases / LayerNorm params / final biases) stay f32, stacked into one array.
    """
    q1, q2 = params["q1"], params["q2"]
    hidden = q1["w2"].shape[0]

    def rows(hp):
        return [hp[k].reshape(hidden)
                for k in ("b1", "g1", "be1", "b2", "g2", "be2", "b3", "g3", "be3")]

    bf_row = jnp.zeros((hidden,), jnp.float32)
    bf_row = bf_row.at[0].set(q1["bf"].reshape(())).at[1].set(q2["bf"].reshape(()))
    vec = jnp.stack(rows(q1) + rows(q2) + [bf_row]).astype(jnp.float32)  # [19, H]
    assert vec.shape[0] == _VEC_ROWS

    return {
        "w1s": jnp.concatenate([q1["w1s"], q2["w1s"]], axis=1).astype(jnp.bfloat16),
        "w1a": jnp.concatenate([q1["w1a"], q2["w1a"]], axis=1).astype(jnp.bfloat16),
        "w2":  jnp.stack([q1["w2"], q2["w2"]]).astype(jnp.bfloat16),
        "w3":  jnp.stack([q1["w3"], q2["w3"]]).astype(jnp.bfloat16),
        "wf":  jnp.concatenate([q1["wf"], q2["wf"]], axis=1).astype(jnp.bfloat16),
        "vec": vec,
    }


def critic_reference(state, action, params, *, use_layernorm):
    """Pure-JAX f32 reference of the PyTorch forward (exact mish / LayerNorm)."""
    def mish(z):
        return z * jnp.tanh(jax.nn.softplus(z))

    def ln(h, g, b, eps=1e-5):
        m = jnp.mean(h, axis=-1, keepdims=True)
        v = jnp.mean((h - m) ** 2, axis=-1, keepdims=True)
        return (h - m) / jnp.sqrt(v + eps) * g + b

    def head(hp):
        h = state @ hp["w1s"] + action @ hp["w1a"] + hp["b1"]
        if use_layernorm:
            h = ln(h, hp["g1"], hp["be1"])
        h = mish(h)
        h = h @ hp["w2"] + hp["b2"]
        if use_layernorm:
            h = ln(h, hp["g2"], hp["be2"])
        h = mish(h)
        h = h @ hp["w3"] + hp["b3"]
        if use_layernorm:
            h = ln(h, hp["g3"], hp["be3"])
        h = mish(h)
        return h @ hp["wf"] + hp["bf"]

    return head(params["q1"]), head(params["q2"])


if __name__ == "__main__":
    B, state_dim, action_dim = 8, 12, 4

    key = jax.random.PRNGKey(0)
    k_par, k_s, k_a = jax.random.split(key, 3)

    params = make_params(k_par, state_dim, action_dim)
    kernel_params = to_kernel_params(params)
    state = jax.random.normal(k_s, (B, state_dim), dtype=jnp.float32)
    action = jax.random.normal(k_a, (B, action_dim), dtype=jnp.float32)

    # rl_type == 'offline' -> LayerNorm; anything else -> Identity.
    for rl_type in ("offline", "online"):
        use_ln = rl_type == "offline"
        q1, q2 = critic_forward(state, action, kernel_params, use_layernorm=use_ln)
        jax.block_until_ready((q1, q2))

        r1, r2 = critic_reference(state, action, params, use_layernorm=use_ln)
        assert q1.shape == (B, 1) and q2.shape == (B, 1)
        # Tolerance covers bf16 weights/activations + approx-reciprocal mish.
        assert jnp.allclose(q1, r1, atol=3e-2, rtol=3e-2), f"q1 mismatch ({rl_type})"
        assert jnp.allclose(q2, r2, atol=3e-2, rtol=3e-2), f"q2 mismatch ({rl_type})"

    print("KERNEL_OK")
</pallas_src>

<mosaic_0001>
module attributes {stable_mosaic.version = 11 : i64} {
  func.func @critic_kernel(%arg0: memref<8x12xf32, #tpu.memory_space<vmem>>, %arg1: memref<8x4xf32, #tpu.memory_space<vmem>>, %arg2: memref<12x512xbf16, #tpu.memory_space<vmem>>, %arg3: memref<4x512xbf16, #tpu.memory_space<vmem>>, %arg4: memref<2x256x256xbf16, #tpu.memory_space<vmem>>, %arg5: memref<2x256x256xbf16, #tpu.memory_space<vmem>>, %arg6: memref<256x2xbf16, #tpu.memory_space<vmem>>, %arg7: memref<19x256xf32, #tpu.memory_space<vmem>>, %arg8: memref<8x2xf32, #tpu.memory_space<vmem>>) attributes {dimension_semantics = [], scalar_prefetch = 0 : i64, scratch_operands = 0 : i64, tpu.core_type = #tpu.core_type<tc>} {
    %c0 = arith.constant 0 : index
    %c0_0 = arith.constant 0 : index
    %0 = vector.load %arg0[%c0, %c0_0] : memref<8x12xf32, #tpu.memory_space<vmem>>, vector<8x12xf32>
    %1 = arith.truncf %0 : vector<8x12xf32> to vector<8x12xbf16>
    %c0_1 = arith.constant 0 : index
    %c0_2 = arith.constant 0 : index
    %2 = vector.load %arg1[%c0_1, %c0_2] : memref<8x4xf32, #tpu.memory_space<vmem>>, vector<8x4xf32>
    %3 = arith.truncf %2 : vector<8x4xf32> to vector<8x4xbf16>
    %c0_3 = arith.constant 0 : index
    %c0_4 = arith.constant 0 : index
    %4 = vector.load %arg7[%c0_3, %c0_4] : memref<19x256xf32, #tpu.memory_space<vmem>>, vector<19x256xf32>
    %c0_5 = arith.constant 0 : index
    %c0_6 = arith.constant 0 : index
    %5 = vector.load %arg2[%c0_5, %c0_6] : memref<12x512xbf16, #tpu.memory_space<vmem>>, vector<12x512xbf16>
    %cst = arith.constant dense<0.000000e+00> : vector<8x512xf32>
    %6 = tpu.matmul %1, %5, %cst {dimension_numbers = #tpu.dot_dimension_numbers<[1], [0], [0], [1], [0, 0, 1, 1], [], []>} : vector<8x12xbf16>, vector<12x512xbf16>, vector<8x512xf32> -> vector<8x512xf32>
    %c0_7 = arith.constant 0 : index
    %c0_8 = arith.constant 0 : index
    %7 = vector.load %arg3[%c0_7, %c0_8] : memref<4x512xbf16, #tpu.memory_space<vmem>>, vector<4x512xbf16>
    %cst_9 = arith.constant dense<0.000000e+00> : vector<8x512xf32>
    %8 = tpu.matmul %3, %7, %cst_9 {dimension_numbers = #tpu.dot_dimension_numbers<[1], [0], [0], [1], [0, 0, 1, 1], [], []>} : vector<8x4xbf16>, vector<4x512xbf16>, vector<8x512xf32> -> vector<8x512xf32>
    %9 = arith.addf %6, %8 : vector<8x512xf32>
    %10 = vector.extract_strided_slice %9 {offsets = [0, 0], sizes = [8, 256], strides = [1, 1]} : vector<8x512xf32> to vector<8x256xf32>
    %c0_10 = arith.constant 0 : index
    %c0_11 = arith.constant 0 : index
    %c0_12 = arith.constant 0 : index
    %11 = vector.load %arg4[%c0_10, %c0_11, %c0_12] : memref<2x256x256xbf16, #tpu.memory_space<vmem>>, vector<1x256x256xbf16>
    %12 = vector.shape_cast %11 : vector<1x256x256xbf16> to vector<256x256xbf16>
    %c0_13 = arith.constant 0 : index
    %c0_14 = arith.constant 0 : index
    %c0_15 = arith.constant 0 : index
    %13 = vector.load %arg5[%c0_13, %c0_14, %c0_15] : memref<2x256x256xbf16, #tpu.memory_space<vmem>>, vector<1x256x256xbf16>
    %14 = vector.shape_cast %13 : vector<1x256x256xbf16> to vector<256x256xbf16>
    %15 = vector.extract_strided_slice %4 {offsets = [0, 0], sizes = [1, 256], strides = [1, 1]} : vector<19x256xf32> to vector<1x256xf32>
    %16 = vector.broadcast %15 : vector<1x256xf32> to vector<8x256xf32>
    %17 = arith.addf %10, %16 : vector<8x256xf32>
    %18 = vector.extract_strided_slice %4 {offsets = [1, 0], sizes = [1, 256], strides = [1, 1]} : vector<19x256xf32> to vector<1x256xf32>
    %19 = vector.extract_strided_slice %4 {offsets = [2, 0], sizes = [1, 256], strides = [1, 1]} : vector<19x256xf32> to vector<1x256xf32>
    %cst_16 = arith.constant dense<0.000000e+00> : vector<8xf32>
    %20 = vector.multi_reduction <add>, %17, %cst_16 [1] : vector<8x256xf32> to vector<8xf32>
    %21 = vector.shape_cast %20 : vector<8xf32> to vector<8x1xf32>
    %cst_17 = arith.constant 2.560000e+02 : f32
    %22 = vector.broadcast %cst_17 : f32 to vector<8x1xf32>
    %23 = arith.divf %21, %22 : vector<8x1xf32>
    %24 = vector.broadcast %23 : vector<8x1xf32> to vector<8x256xf32>
    %25 = arith.subf %17, %24 : vector<8x256xf32>
    %26 = arith.mulf %25, %25 : vector<8x256xf32>
    %cst_18 = arith.constant dense<0.000000e+00> : vector<8xf32>
    %27 = vector.multi_reduction <add>, %26, %cst_18 [1] : vector<8x256xf32> to vector<8xf32>
    %28 = vector.shape_cast %27 : vector<8xf32> to vector<8x1xf32>
    %cst_19 = arith.constant 2.560000e+02 : f32
    %29 = vector.broadcast %cst_19 : f32 to vector<8x1xf32>
    %30 = arith.divf %28, %29 : vector<8x1xf32>
    %cst_20 = arith.constant 9.99999974E-6 : f32
    %31 = vector.broadcast %cst_20 : f32 to vector<8x1xf32>
    %32 = arith.addf %30, %31 : vector<8x1xf32>
    %33 = math.rsqrt %32 : vector<8x1xf32>
    %34 = vector.broadcast %33 : vector<8x1xf32> to vector<8x256xf32>
    %35 = arith.mulf %25, %34 : vector<8x256xf32>
    %36 = vector.broadcast %18 : vector<1x256xf32> to vector<8x256xf32>
    %37 = arith.mulf %35, %36 : vector<8x256xf32>
    %38 = vector.broadcast %19 : vector<1x256xf32> to vector<8x256xf32>
    %39 = arith.addf %37, %38 : vector<8x256xf32>
    %40 = math.absf %39 : vector<8x256xf32>
    %cst_21 = arith.constant 0.000000e+00 : f32
    %41 = vector.broadcast %cst_21 : f32 to vector<8x256xf32>
    %42 = arith.subf %41, %40 : vector<8x256xf32>
    %43 = math.exp %42 : vector<8x256xf32>
    %44 = arith.mulf %43, %43 : vector<8x256xf32>
    %cst_22 = arith.constant 0.000000e+00 : f32
    %45 = vector.broadcast %cst_22 : f32 to vector<8x256xf32>
    %46 = arith.cmpf oge, %39, %45 : vector<8x256xf32>
    %cst_23 = arith.constant 2.000000e+00 : f32
    %47 = vector.broadcast %cst_23 : f32 to vector<8x256xf32>
    %48 = arith.mulf %47, %43 : vector<8x256xf32>
    %cst_24 = arith.constant 1.000000e+00 : f32
    %49 = vector.broadcast %cst_24 : f32 to vector<8x256xf32>
    %50 = arith.addf %49, %48 : vector<8x256xf32>
    %cst_25 = arith.constant 2.000000e+00 : f32
    %51 = vector.broadcast %cst_25 : f32 to vector<8x256xf32>
    %52 = arith.mulf %51, %43 : vector<8x256xf32>
    %53 = arith.addf %52, %44 : vector<8x256xf32>
    %54 = arith.select %46, %50, %53 : vector<8x256xi1>, vector<8x256xf32>
    %cst_26 = arith.constant 2.000000e+00 : f32
    %55 = vector.broadcast %cst_26 : f32 to vector<8x256xf32>
    %56 = arith.mulf %55, %43 : vector<8x256xf32>
    %cst_27 = arith.constant 1.000000e+00 : f32
    %57 = vector.broadcast %cst_27 : f32 to vector<8x256xf32>
    %58 = arith.addf %57, %56 : vector<8x256xf32>
    %cst_28 = arith.constant 2.000000e+00 : f32
    %59 = vector.broadcast %cst_28 : f32 to vector<8x256xf32>
    %60 = arith.mulf %59, %44 : vector<8x256xf32>
    %61 = arith.addf %58, %60 : vector<8x256xf32>
    %cst_29 = arith.constant 2.000000e+00 : f32
    %62 = vector.broadcast %cst_29 : f32 to vector<8x256xf32>
    %63 = arith.mulf %62, %43 : vector<8x256xf32>
    %cst_30 = arith.constant 2.000000e+00 : f32
    %64 = vector.broadcast %cst_30 : f32 to vector<8x256xf32>
    %65 = arith.addf %64, %63 : vector<8x256xf32>
    %66 = arith.addf %65, %44 : vector<8x256xf32>
    %67 = arith.select %46, %61, %66 : vector<8x256xi1>, vector<8x256xf32>
    %68 = arith.mulf %39, %54 : vector<8x256xf32>
    %69 = tpu.reciprocal %67 {approx = true} : vector<8x256xf32> -> vector<8x256xf32>
    %70 = arith.mulf %68, %69 : vector<8x256xf32>
    %71 = arith.truncf %70 : vector<8x256xf32> to vector<8x256xbf16>
    %cst_31 = arith.constant dense<0.000000e+00> : vector<8x256xf32>
    %72 = tpu.matmul %71, %12, %cst_31 {dimension_numbers = #tpu.dot_dimension_numbers<[1], [0], [0], [1], [0, 0, 1, 1], [], []>} : vector<8x256xbf16>, vector<256x256xbf16>, vector<8x256xf32> -> vector<8x256xf32>
    %73 = vector.extract_strided_slice %4 {offsets = [3, 0], sizes = [1, 256], strides = [1, 1]} : vector<19x256xf32> to vector<1x256xf32>
    %74 = vector.broadcast %73 : vector<1x256xf32> to vector<8x256xf32>
    %75 = arith.addf %72, %74 : vector<8x256xf32>
    %76 = vector.extract_strided_slice %4 {offsets = [4, 0], sizes = [1, 256], strides = [1, 1]} : vector<19x256xf32> to vector<1x256xf32>
    %77 = vector.extract_strided_slice %4 {offsets = [5, 0], sizes = [1, 256], strides = [1, 1]} : vector<19x256xf32> to vector<1x256xf32>
    %cst_32 = arith.constant dense<0.000000e+00> : vector<8xf32>
    %78 = vector.multi_reduction <add>, %75, %cst_32 [1] : vector<8x256xf32> to vector<8xf32>
    %79 = vector.shape_cast %78 : vector<8xf32> to vector<8x1xf32>
    %cst_33 = arith.constant 2.560000e+02 : f32
    %80 = vector.broadcast %cst_33 : f32 to vector<8x1xf32>
    %81 = arith.divf %79, %80 : vector<8x1xf32>
    %82 = vector.broadcast %81 : vector<8x1xf32> to vector<8x256xf32>
    %83 = arith.subf %75, %82 : vector<8x256xf32>
    %84 = arith.mulf %83, %83 : vector<8x256xf32>
    %cst_34 = arith.constant dense<0.000000e+00> : vector<8xf32>
    %85 = vector.multi_reduction <add>, %84, %cst_34 [1] : vector<8x256xf32> to vector<8xf32>
    %86 = vector.shape_cast %85 : vector<8xf32> to vector<8x1xf32>
    %cst_35 = arith.constant 2.560000e+02 : f32
    %87 = vector.broadcast %cst_35 : f32 to vector<8x1xf32>
    %88 = arith.divf %86, %87 : vector<8x1xf32>
    %cst_36 = arith.constant 9.99999974E-6 : f32
    %89 = vector.broadcast %cst_36 : f32 to vector<8x1xf32>
    %90 = arith.addf %88, %89 : vector<8x1xf32>
    %91 = math.rsqrt %90 : vector<8x1xf32>
    %92 = vector.broadcast %91 : vector<8x1xf32> to vector<8x256xf32>
    %93 = arith.mulf %83, %92 : vector<8x256xf32>
    %94 = vector.broadcast %76 : vector<1x256xf32> to vector<8x256xf32>
    %95 = arith.mulf %93, %94 : vector<8x256xf32>
    %96 = vector.broadcast %77 : vector<1x256xf32> to vector<8x256xf32>
    %97 = arith.addf %95, %96 : vector<8x256xf32>
    %98 = math.absf %97 : vector<8x256xf32>
    %cst_37 = arith.constant 0.000000e+00 : f32
    %99 = vector.broadcast %cst_37 : f32 to vector<8x256xf32>
    %100 = arith.subf %99, %98 : vector<8x256xf32>
    %101 = math.exp %100 : vector<8x256xf32>
    %102 = arith.mulf %101, %101 : vector<8x256xf32>
    %cst_38 = arith.constant 0.000000e+00 : f32
    %103 = vector.broadcast %cst_38 : f32 to vector<8x256xf32>
    %104 = arith.cmpf oge, %97, %103 : vector<8x256xf32>
    %cst_39 = arith.constant 2.000000e+00 : f32
    %105 = vector.broadcast %cst_39 : f32 to vector<8x256xf32>
    %106 = arith.mulf %105, %101 : vector<8x256xf32>
    %cst_40 = arith.constant 1.000000e+00 : f32
    %107 = vector.broadcast %cst_40 : f32 to vector<8x256xf32>
    %108 = arith.addf %107, %106 : vector<8x256xf32>
    %cst_41 = arith.constant 2.000000e+00 : f32
    %109 = vector.broadcast %cst_41 : f32 to vector<8x256xf32>
    %110 = arith.mulf %109, %101 : vector<8x256xf32>
    %111 = arith.addf %110, %102 : vector<8x256xf32>
    %112 = arith.select %104, %108, %111 : vector<8x256xi1>, vector<8x256xf32>
    %cst_42 = arith.constant 2.000000e+00 : f32
    %113 = vector.broadcast %cst_42 : f32 to vector<8x256xf32>
    %114 = arith.mulf %113, %101 : vector<8x256xf32>
    %cst_43 = arith.constant 1.000000e+00 : f32
    %115 = vector.broadcast %cst_43 : f32 to vector<8x256xf32>
    %116 = arith.addf %115, %114 : vector<8x256xf32>
    %cst_44 = arith.constant 2.000000e+00 : f32
    %117 = vector.broadcast %cst_44 : f32 to vector<8x256xf32>
    %118 = arith.mulf %117, %102 : vector<8x256xf32>
    %119 = arith.addf %116, %118 : vector<8x256xf32>
    %cst_45 = arith.constant 2.000000e+00 : f32
    %120 = vector.broadcast %cst_45 : f32 to vector<8x256xf32>
    %121 = arith.mulf %120, %101 : vector<8x256xf32>
    %cst_46 = arith.constant 2.000000e+00 : f32
    %122 = vector.broadcast %cst_46 : f32 to vector<8x256xf32>
    %123 = arith.addf %122, %121 : vector<8x256xf32>
    %124 = arith.addf %123, %102 : vector<8x256xf32>
    %125 = arith.select %104, %119, %124 : vector<8x256xi1>, vector<8x256xf32>
    %126 = arith.mulf %97, %112 : vector<8x256xf32>
    %127 = tpu.reciprocal %125 {approx = true} : vector<8x256xf32> -> vector<8x256xf32>
    %128 = arith.mulf %126, %127 : vector<8x256xf32>
    %129 = arith.truncf %128 : vector<8x256xf32> to vector<8x256xbf16>
    %cst_47 = arith.constant dense<0.000000e+00> : vector<8x256xf32>
    %130 = tpu.matmul %129, %14, %cst_47 {dimension_numbers = #tpu.dot_dimension_numbers<[1], [0], [0], [1], [0, 0, 1, 1], [], []>} : vector<8x256xbf16>, vector<256x256xbf16>, vector<8x256xf32> -> vector<8x256xf32>
    %131 = vector.extract_strided_slice %4 {offsets = [6, 0], sizes = [1, 256], strides = [1, 1]} : vector<19x256xf32> to vector<1x256xf32>
    %132 = vector.broadcast %131 : vector<1x256xf32> to vector<8x256xf32>
    %133 = arith.addf %130, %132 : vector<8x256xf32>
    %134 = vector.extract_strided_slice %4 {offsets = [7, 0], sizes = [1, 256], strides = [1, 1]} : vector<19x256xf32> to vector<1x256xf32>
    %135 = vector.extract_strided_slice %4 {offsets = [8, 0], sizes = [1, 256], strides = [1, 1]} : vector<19x256xf32> to vector<1x256xf32>
    %cst_48 = arith.constant dense<0.000000e+00> : vector<8xf32>
    %136 = vector.multi_reduction <add>, %133, %cst_48 [1] : vector<8x256xf32> to vector<8xf32>
    %137 = vector.shape_cast %136 : vector<8xf32> to vector<8x1xf32>
    %cst_49 = arith.constant 2.560000e+02 : f32
    %138 = vector.broadcast %cst_49 : f32 to vector<8x1xf32>
    %139 = arith.divf %137, %138 : vector<8x1xf32>
    %140 = vector.broadcast %139 : vector<8x1xf32> to vector<8x256xf32>
    %141 = arith.subf %133, %140 : vector<8x256xf32>
    %142 = arith.mulf %141, %141 : vector<8x256xf32>
    %cst_50 = arith.constant dense<0.000000e+00> : vector<8xf32>
    %143 = vector.multi_reduction <add>, %142, %cst_50 [1] : vector<8x256xf32> to vector<8xf32>
    %144 = vector.shape_cast %143 : vector<8xf32> to vector<8x1xf32>
    %cst_51 = arith.constant 2.560000e+02 : f32
    %145 = vector.broadcast %cst_51 : f32 to vector<8x1xf32>
    %146 = arith.divf %144, %145 : vector<8x1xf32>
    %cst_52 = arith.constant 9.99999974E-6 : f32
    %147 = vector.broadcast %cst_52 : f32 to vector<8x1xf32>
    %148 = arith.addf %146, %147 : vector<8x1xf32>
    %149 = math.rsqrt %148 : vector<8x1xf32>
    %150 = vector.broadcast %149 : vector<8x1xf32> to vector<8x256xf32>
    %151 = arith.mulf %141, %150 : vector<8x256xf32>
    %152 = vector.broadcast %134 : vector<1x256xf32> to vector<8x256xf32>
    %153 = arith.mulf %151, %152 : vector<8x256xf32>
    %154 = vector.broadcast %135 : vector<1x256xf32> to vector<8x256xf32>
    %155 = arith.addf %153, %154 : vector<8x256xf32>
    %156 = math.absf %155 : vector<8x256xf32>
    %cst_53 = arith.constant 0.000000e+00 : f32
    %157 = vector.broadcast %cst_53 : f32 to vector<8x256xf32>
    %158 = arith.subf %157, %156 : vector<8x256xf32>
    %159 = math.exp %158 : vector<8x256xf32>
    %160 = arith.mulf %159, %159 : vector<8x256xf32>
    %cst_54 = arith.constant 0.000000e+00 : f32
    %161 = vector.broadcast %cst_54 : f32 to vector<8x256xf32>
    %162 = arith.cmpf oge, %155, %161 : vector<8x256xf32>
    %cst_55 = arith.constant 2.000000e+00 : f32
    %163 = vector.broadcast %cst_55 : f32 to vector<8x256xf32>
    %164 = arith.mulf %163, %159 : vector<8x256xf32>
    %cst_56 = arith.constant 1.000000e+00 : f32
    %165 = vector.broadcast %cst_56 : f32 to vector<8x256xf32>
    %166 = arith.addf %165, %164 : vector<8x256xf32>
    %cst_57 = arith.constant 2.000000e+00 : f32
    %167 = vector.broadcast %cst_57 : f32 to vector<8x256xf32>
    %168 = arith.mulf %167, %159 : vector<8x256xf32>
    %169 = arith.addf %168, %160 : vector<8x256xf32>
    %170 = arith.select %162, %166, %169 : vector<8x256xi1>, vector<8x256xf32>
    %cst_58 = arith.constant 2.000000e+00 : f32
    %171 = vector.broadcast %cst_58 : f32 to vector<8x256xf32>
    %172 = arith.mulf %171, %159 : vector<8x256xf32>
    %cst_59 = arith.constant 1.000000e+00 : f32
    %173 = vector.broadcast %cst_59 : f32 to vector<8x256xf32>
    %174 = arith.addf %173, %172 : vector<8x256xf32>
    %cst_60 = arith.constant 2.000000e+00 : f32
    %175 = vector.broadcast %cst_60 : f32 to vector<8x256xf32>
    %176 = arith.mulf %175, %160 : vector<8x256xf32>
    %177 = arith.addf %174, %176 : vector<8x256xf32>
    %cst_61 = arith.constant 2.000000e+00 : f32
    %178 = vector.broadcast %cst_61 : f32 to vector<8x256xf32>
    %179 = arith.mulf %178, %159 : vector<8x256xf32>
    %cst_62 = arith.constant 2.000000e+00 : f32
    %180 = vector.broadcast %cst_62 : f32 to vector<8x256xf32>
    %181 = arith.addf %180, %179 : vector<8x256xf32>
    %182 = arith.addf %181, %160 : vector<8x256xf32>
    %183 = arith.select %162, %177, %182 : vector<8x256xi1>, vector<8x256xf32>
    %184 = arith.mulf %155, %170 : vector<8x256xf32>
    %185 = tpu.reciprocal %183 {approx = true} : vector<8x256xf32> -> vector<8x256xf32>
    %186 = arith.mulf %184, %185 : vector<8x256xf32>
    %187 = arith.truncf %186 : vector<8x256xf32> to vector<8x256xbf16>
    %c0_63 = arith.constant 0 : index
    %c0_64 = arith.constant 0 : index
    %188 = vector.load %arg6[%c0_63, %c0_64] : memref<256x2xbf16, #tpu.memory_space<vmem>>, vector<256x2xbf16>
    %cst_65 = arith.constant dense<0.000000e+00> : vector<8x2xf32>
    %189 = tpu.matmul %187, %188, %cst_65 {dimension_numbers = #tpu.dot_dimension_numbers<[1], [0], [0], [1], [0, 0, 1, 1], [], []>} : vector<8x256xbf16>, vector<256x2xbf16>, vector<8x2xf32> -> vector<8x2xf32>
    %190 = vector.extract_strided_slice %9 {offsets = [0, 256], sizes = [8, 256], strides = [1, 1]} : vector<8x512xf32> to vector<8x256xf32>
    %c1 = arith.constant 1 : index
    %c0_66 = arith.constant 0 : index
    %c0_67 = arith.constant 0 : index
    %191 = vector.load %arg4[%c1, %c0_66, %c0_67] : memref<2x256x256xbf16, #tpu.memory_space<vmem>>, vector<1x256x256xbf16>
    %192 = vector.shape_cast %191 : vector<1x256x256xbf16> to vector<256x256xbf16>
    %c1_68 = arith.constant 1 : index
    %c0_69 = arith.constant 0 : index
    %c0_70 = arith.constant 0 : index
    %193 = vector.load %arg5[%c1_68, %c0_69, %c0_70] : memref<2x256x256xbf16, #tpu.memory_space<vmem>>, vector<1x256x256xbf16>
    %194 = vector.shape_cast %193 : vector<1x256x256xbf16> to vector<256x256xbf16>
    %195 = vector.extract_strided_slice %4 {offsets = [9, 0], sizes = [1, 256], strides = [1, 1]} : vector<19x256xf32> to vector<1x256xf32>
    %196 = vector.broadcast %195 : vector<1x256xf32> to vector<8x256xf32>
    %197 = arith.addf %190, %196 : vector<8x256xf32>
    %198 = vector.extract_strided_slice %4 {offsets = [10, 0], sizes = [1, 256], strides = [1, 1]} : vector<19x256xf32> to vector<1x256xf32>
    %199 = vector.extract_strided_slice %4 {offsets = [11, 0], sizes = [1, 256], strides = [1, 1]} : vector<19x256xf32> to vector<1x256xf32>
    %cst_71 = arith.constant dense<0.000000e+00> : vector<8xf32>
    %200 = vector.multi_reduction <add>, %197, %cst_71 [1] : vector<8x256xf32> to vector<8xf32>
    %201 = vector.shape_cast %200 : vector<8xf32> to vector<8x1xf32>
    %cst_72 = arith.constant 2.560000e+02 : f32
    %202 = vector.broadcast %cst_72 : f32 to vector<8x1xf32>
    %203 = arith.divf %201, %202 : vector<8x1xf32>
    %204 = vector.broadcast %203 : vector<8x1xf32> to vector<8x256xf32>
    %205 = arith.subf %197, %204 : vector<8x256xf32>
    %206 = arith.mulf %205, %205 : vector<8x256xf32>
    %cst_73 = arith.constant dense<0.000000e+00> : vector<8xf32>
    %207 = vector.multi_reduction <add>, %206, %cst_73 [1] : vector<8x256xf32> to vector<8xf32>
    %208 = vector.shape_cast %207 : vector<8xf32> to vector<8x1xf32>
    %cst_74 = arith.constant 2.560000e+02 : f32
    %209 = vector.broadcast %cst_74 : f32 to vector<8x1xf32>
    %210 = arith.divf %208, %209 : vector<8x1xf32>
    %cst_75 = arith.constant 9.99999974E-6 : f32
    %211 = vector.broadcast %cst_75 : f32 to vector<8x1xf32>
    %212 = arith.addf %210, %211 : vector<8x1xf32>
    %213 = math.rsqrt %212 : vector<8x1xf32>
    %214 = vector.broadcast %213 : vector<8x1xf32> to vector<8x256xf32>
    %215 = arith.mulf %205, %214 : vector<8x256xf32>
    %216 = vector.broadcast %198 : vector<1x256xf32> to vector<8x256xf32>
    %217 = arith.mulf %215, %216 : vector<8x256xf32>
    %218 = vector.broadcast %199 : vector<1x256xf32> to vector<8x256xf32>
    %219 = arith.addf %217, %218 : vector<8x256xf32>
    %220 = math.absf %219 : vector<8x256xf32>
    %cst_76 = arith.constant 0.000000e+00 : f32
    %221 = vector.broadcast %cst_76 : f32 to vector<8x256xf32>
    %222 = arith.subf %221, %220 : vector<8x256xf32>
    %223 = math.exp %222 : vector<8x256xf32>
    %224 = arith.mulf %223, %223 : vector<8x256xf32>
    %cst_77 = arith.constant 0.000000e+00 : f32
    %225 = vector.broadcast %cst_77 : f32 to vector<8x256xf32>
    %226 = arith.cmpf oge, %219, %225 : vector<8x256xf32>
    %cst_78 = arith.constant 2.000000e+00 : f32
    %227 = vector.broadcast %cst_78 : f32 to vector<8x256xf32>
    %228 = arith.mulf %227, %223 : vector<8x256xf32>
    %cst_79 = arith.constant 1.000000e+00 : f32
    %229 = vector.broadcast %cst_79 : f32 to vector<8x256xf32>
    %230 = arith.addf %229, %228 : vector<8x256xf32>
    %cst_80 = arith.constant 2.000000e+00 : f32
    %231 = vector.broadcast %cst_80 : f32 to vector<8x256xf32>
    %232 = arith.mulf %231, %223 : vector<8x256xf32>
    %233 = arith.addf %232, %224 : vector<8x256xf32>
    %234 = arith.select %226, %230, %233 : vector<8x256xi1>, vector<8x256xf32>
    %cst_81 = arith.constant 2.000000e+00 : f32
    %235 = vector.broadcast %cst_81 : f32 to vector<8x256xf32>
    %236 = arith.mulf %235, %223 : vector<8x256xf32>
    %cst_82 = arith.constant 1.000000e+00 : f32
    %237 = vector.broadcast %cst_82 : f32 to vector<8x256xf32>
    %238 = arith.addf %237, %236 : vector<8x256xf32>
    %cst_83 = arith.constant 2.000000e+00 : f32
    %239 = vector.broadcast %cst_83 : f32 to vector<8x256xf32>
    %240 = arith.mulf %239, %224 : vector<8x256xf32>
    %241 = arith.addf %238, %240 : vector<8x256xf32>
    %cst_84 = arith.constant 2.000000e+00 : f32
    %242 = vector.broadcast %cst_84 : f32 to vector<8x256xf32>
    %243 = arith.mulf %242, %223 : vector<8x256xf32>
    %cst_85 = arith.constant 2.000000e+00 : f32
    %244 = vector.broadcast %cst_85 : f32 to vector<8x256xf32>
    %245 = arith.addf %244, %243 : vector<8x256xf32>
    %246 = arith.addf %245, %224 : vector<8x256xf32>
    %247 = arith.select %226, %241, %246 : vector<8x256xi1>, vector<8x256xf32>
    %248 = arith.mulf %219, %234 : vector<8x256xf32>
    %249 = tpu.reciprocal %247 {approx = true} : vector<8x256xf32> -> vector<8x256xf32>
    %250 = arith.mulf %248, %249 : vector<8x256xf32>
    %251 = arith.truncf %250 : vector<8x256xf32> to vector<8x256xbf16>
    %cst_86 = arith.constant dense<0.000000e+00> : vector<8x256xf32>
    %252 = tpu.matmul %251, %192, %cst_86 {dimension_numbers = #tpu.dot_dimension_numbers<[1], [0], [0], [1], [0, 0, 1, 1], [], []>} : vector<8x256xbf16>, vector<256x256xbf16>, vector<8x256xf32> -> vector<8x256xf32>
    %253 = vector.extract_strided_slice %4 {offsets = [12, 0], sizes = [1, 256], strides = [1, 1]} : vector<19x256xf32> to vector<1x256xf32>
    %254 = vector.broadcast %253 : vector<1x256xf32> to vector<8x256xf32>
    %255 = arith.addf %252, %254 : vector<8x256xf32>
    %256 = vector.extract_strided_slice %4 {offsets = [13, 0], sizes = [1, 256], strides = [1, 1]} : vector<19x256xf32> to vector<1x256xf32>
    %257 = vector.extract_strided_slice %4 {offsets = [14, 0], sizes = [1, 256], strides = [1, 1]} : vector<19x256xf32> to vector<1x256xf32>
    %cst_87 = arith.constant dense<0.000000e+00> : vector<8xf32>
    %258 = vector.multi_reduction <add>, %255, %cst_87 [1] : vector<8x256xf32> to vector<8xf32>
    %259 = vector.shape_cast %258 : vector<8xf32> to vector<8x1xf32>
    %cst_88 = arith.constant 2.560000e+02 : f32
    %260 = vector.broadcast %cst_88 : f32 to vector<8x1xf32>
    %261 = arith.divf %259, %260 : vector<8x1xf32>
    %262 = vector.broadcast %261 : vector<8x1xf32> to vector<8x256xf32>
    %263 = arith.subf %255, %262 : vector<8x256xf32>
    %264 = arith.mulf %263, %263 : vector<8x256xf32>
    %cst_89 = arith.constant dense<0.000000e+00> : vector<8xf32>
    %265 = vector.multi_reduction <add>, %264, %cst_89 [1] : vector<8x256xf32> to vector<8xf32>
    %266 = vector.shape_cast %265 : vector<8xf32> to vector<8x1xf32>
    %cst_90 = arith.constant 2.560000e+02 : f32
    %267 = vector.broadcast %cst_90 : f32 to vector<8x1xf32>
    %268 = arith.divf %266, %267 : vector<8x1xf32>
    %cst_91 = arith.constant 9.99999974E-6 : f32
    %269 = vector.broadcast %cst_91 : f32 to vector<8x1xf32>
    %270 = arith.addf %268, %269 : vector<8x1xf32>
    %271 = math.rsqrt %270 : vector<8x1xf32>
    %272 = vector.broadcast %271 : vector<8x1xf32> to vector<8x256xf32>
    %273 = arith.mulf %263, %272 : vector<8x256xf32>
    %274 = vector.broadcast %256 : vector<1x256xf32> to vector<8x256xf32>
    %275 = arith.mulf %273, %274 : vector<8x256xf32>
    %276 = vector.broadcast %257 : vector<1x256xf32> to vector<8x256xf32>
    %277 = arith.addf %275, %276 : vector<8x256xf32>
    %278 = math.absf %277 : vector<8x256xf32>
    %cst_92 = arith.constant 0.000000e+00 : f32
    %279 = vector.broadcast %cst_92 : f32 to vector<8x256xf32>
    %280 = arith.subf %279, %278 : vector<8x256xf32>
    %281 = math.exp %280 : vector<8x256xf32>
    %282 = arith.mulf %281, %281 : vector<8x256xf32>
    %cst_93 = arith.constant 0.000000e+00 : f32
    %283 = vector.broadcast %cst_93 : f32 to vector<8x256xf32>
    %284 = arith.cmpf oge, %277, %283 : vector<8x256xf32>
    %cst_94 = arith.constant 2.000000e+00 : f32
    %285 = vector.broadcast %cst_94 : f32 to vector<8x256xf32>
    %286 = arith.mulf %285, %281 : vector<8x256xf32>
    %cst_95 = arith.constant 1.000000e+00 : f32
    %287 = vector.broadcast %cst_95 : f32 to vector<8x256xf32>
    %288 = arith.addf %287, %286 : vector<8x256xf32>
    %cst_96 = arith.constant 2.000000e+00 : f32
    %289 = vector.broadcast %cst_96 : f32 to vector<8x256xf32>
    %290 = arith.mulf %289, %281 : vector<8x256xf32>
    %291 = arith.addf %290, %282 : vector<8x256xf32>
    %292 = arith.select %284, %288, %291 : vector<8x256xi1>, vector<8x256xf32>
    %cst_97 = arith.constant 2.000000e+00 : f32
    %293 = vector.broadcast %cst_97 : f32 to vector<8x256xf32>
    %294 = arith.mulf %293, %281 : vector<8x256xf32>
    %cst_98 = arith.constant 1.000000e+00 : f32
    %295 = vector.broadcast %cst_98 : f32 to vector<8x256xf32>
    %296 = arith.addf %295, %294 : vector<8x256xf32>
    %cst_99 = arith.constant 2.000000e+00 : f32
    %297 = vector.broadcast %cst_99 : f32 to vector<8x256xf32>
    %298 = arith.mulf %297, %282 : vector<8x256xf32>
    %299 = arith.addf %296, %298 : vector<8x256xf32>
    %cst_100 = arith.constant 2.000000e+00 : f32
    %300 = vector.broadcast %cst_100 : f32 to vector<8x256xf32>
    %301 = arith.mulf %300, %281 : vector<8x256xf32>
    %cst_101 = arith.constant 2.000000e+00 : f32
    %302 = vector.broadcast %cst_101 : f32 to vector<8x256xf32>
    %303 = arith.addf %302, %301 : vector<8x256xf32>
    %304 = arith.addf %303, %282 : vector<8x256xf32>
    %305 = arith.select %284, %299, %304 : vector<8x256xi1>, vector<8x256xf32>
    %306 = arith.mulf %277, %292 : vector<8x256xf32>
    %307 = tpu.reciprocal %305 {approx = true} : vector<8x256xf32> -> vector<8x256xf32>
    %308 = arith.mulf %306, %307 : vector<8x256xf32>
    %309 = arith.truncf %308 : vector<8x256xf32> to vector<8x256xbf16>
    %cst_102 = arith.constant dense<0.000000e+00> : vector<8x256xf32>
    %310 = tpu.matmul %309, %194, %cst_102 {dimension_numbers = #tpu.dot_dimension_numbers<[1], [0], [0], [1], [0, 0, 1, 1], [], []>} : vector<8x256xbf16>, vector<256x256xbf16>, vector<8x256xf32> -> vector<8x256xf32>
    %311 = vector.extract_strided_slice %4 {offsets = [15, 0], sizes = [1, 256], strides = [1, 1]} : vector<19x256xf32> to vector<1x256xf32>
    %312 = vector.broadcast %311 : vector<1x256xf32> to vector<8x256xf32>
    %313 = arith.addf %310, %312 : vector<8x256xf32>
    %314 = vector.extract_strided_slice %4 {offsets = [16, 0], sizes = [1, 256], strides = [1, 1]} : vector<19x256xf32> to vector<1x256xf32>
    %315 = vector.extract_strided_slice %4 {offsets = [17, 0], sizes = [1, 256], strides = [1, 1]} : vector<19x256xf32> to vector<1x256xf32>
    %cst_103 = arith.constant dense<0.000000e+00> : vector<8xf32>
    %316 = vector.multi_reduction <add>, %313, %cst_103 [1] : vector<8x256xf32> to vector<8xf32>
    %317 = vector.shape_cast %316 : vector<8xf32> to vector<8x1xf32>
    %cst_104 = arith.constant 2.560000e+02 : f32
    %318 = vector.broadcast %cst_104 : f32 to vector<8x1xf32>
    %319 = arith.divf %317, %318 : vector<8x1xf32>
    %320 = vector.broadcast %319 : vector<8x1xf32> to vector<8x256xf32>
    %321 = arith.subf %313, %320 : vector<8x256xf32>
    %322 = arith.mulf %321, %321 : vector<8x256xf32>
    %cst_105 = arith.constant dense<0.000000e+00> : vector<8xf32>
    %323 = vector.multi_reduction <add>, %322, %cst_105 [1] : vector<8x256xf32> to vector<8xf32>
    %324 = vector.shape_cast %323 : vector<8xf32> to vector<8x1xf32>
    %cst_106 = arith.constant 2.560000e+02 : f32
    %325 = vector.broadcast %cst_106 : f32 to vector<8x1xf32>
    %326 = arith.divf %324, %325 : vector<8x1xf32>
    %cst_107 = arith.constant 9.99999974E-6 : f32
    %327 = vector.broadcast %cst_107 : f32 to vector<8x1xf32>
    %328 = arith.addf %326, %327 : vector<8x1xf32>
    %329 = math.rsqrt %328 : vector<8x1xf32>
    %330 = vector.broadcast %329 : vector<8x1xf32> to vector<8x256xf32>
    %331 = arith.mulf %321, %330 : vector<8x256xf32>
    %332 = vector.broadcast %314 : vector<1x256xf32> to vector<8x256xf32>
    %333 = arith.mulf %331, %332 : vector<8x256xf32>
    %334 = vector.broadcast %315 : vector<1x256xf32> to vector<8x256xf32>
    %335 = arith.addf %333, %334 : vector<8x256xf32>
    %336 = math.absf %335 : vector<8x256xf32>
    %cst_108 = arith.constant 0.000000e+00 : f32
    %337 = vector.broadcast %cst_108 : f32 to vector<8x256xf32>
    %338 = arith.subf %337, %336 : vector<8x256xf32>
    %339 = math.exp %338 : vector<8x256xf32>
    %340 = arith.mulf %339, %339 : vector<8x256xf32>
    %cst_109 = arith.constant 0.000000e+00 : f32
    %341 = vector.broadcast %cst_109 : f32 to vector<8x256xf32>
    %342 = arith.cmpf oge, %335, %341 : vector<8x256xf32>
    %cst_110 = arith.constant 2.000000e+00 : f32
    %343 = vector.broadcast %cst_110 : f32 to vector<8x256xf32>
    %344 = arith.mulf %343, %339 : vector<8x256xf32>
    %cst_111 = arith.constant 1.000000e+00 : f32
    %345 = vector.broadcast %cst_111 : f32 to vector<8x256xf32>
    %346 = arith.addf %345, %344 : vector<8x256xf32>
    %cst_112 = arith.constant 2.000000e+00 : f32
    %347 = vector.broadcast %cst_112 : f32 to vector<8x256xf32>
    %348 = arith.mulf %347, %339 : vector<8x256xf32>
    %349 = arith.addf %348, %340 : vector<8x256xf32>
    %350 = arith.select %342, %346, %349 : vector<8x256xi1>, vector<8x256xf32>
    %cst_113 = arith.constant 2.000000e+00 : f32
    %351 = vector.broadcast %cst_113 : f32 to vector<8x256xf32>
    %352 = arith.mulf %351, %339 : vector<8x256xf32>
    %cst_114 = arith.constant 1.000000e+00 : f32
    %353 = vector.broadcast %cst_114 : f32 to vector<8x256xf32>
    %354 = arith.addf %353, %352 : vector<8x256xf32>
    %cst_115 = arith.constant 2.000000e+00 : f32
    %355 = vector.broadcast %cst_115 : f32 to vector<8x256xf32>
    %356 = arith.mulf %355, %340 : vector<8x256xf32>
    %357 = arith.addf %354, %356 : vector<8x256xf32>
    %cst_116 = arith.constant 2.000000e+00 : f32
    %358 = vector.broadcast %cst_116 : f32 to vector<8x256xf32>
    %359 = arith.mulf %358, %339 : vector<8x256xf32>
    %cst_117 = arith.constant 2.000000e+00 : f32
    %360 = vector.broadcast %cst_117 : f32 to vector<8x256xf32>
    %361 = arith.addf %360, %359 : vector<8x256xf32>
    %362 = arith.addf %361, %340 : vector<8x256xf32>
    %363 = arith.select %342, %357, %362 : vector<8x256xi1>, vector<8x256xf32>
    %364 = arith.mulf %335, %350 : vector<8x256xf32>
    %365 = tpu.reciprocal %363 {approx = true} : vector<8x256xf32> -> vector<8x256xf32>
    %366 = arith.mulf %364, %365 : vector<8x256xf32>
    %367 = arith.truncf %366 : vector<8x256xf32> to vector<8x256xbf16>
    %c0_118 = arith.constant 0 : index
    %c0_119 = arith.constant 0 : index
    %368 = vector.load %arg6[%c0_118, %c0_119] : memref<256x2xbf16, #tpu.memory_space<vmem>>, vector<256x2xbf16>
    %cst_120 = arith.constant dense<0.000000e+00> : vector<8x2xf32>
    %369 = tpu.matmul %367, %368, %cst_120 {dimension_numbers = #tpu.dot_dimension_numbers<[1], [0], [0], [1], [0, 0, 1, 1], [], []>} : vector<8x256xbf16>, vector<256x2xbf16>, vector<8x2xf32> -> vector<8x2xf32>
    %370 = vector.extract_strided_slice %4 {offsets = [18, 0], sizes = [1, 2], strides = [1, 1]} : vector<19x256xf32> to vector<1x2xf32>
    %371 = tpu.iota {dimensions = array<i32: 1>} : vector<8x2xi32>
    %c0_i32 = arith.constant 0 : i32
    %372 = vector.broadcast %c0_i32 : i32 to vector<8x2xi32>
    %373 = arith.cmpi eq, %371, %372 : vector<8x2xi32>
    %374 = arith.select %373, %189, %369 : vector<8x2xi1>, vector<8x2xf32>
    %375 = vector.broadcast %370 : vector<1x2xf32> to vector<8x2xf32>
    %376 = arith.addf %374, %375 : vector<8x2xf32>
    %c0_121 = arith.constant 0 : index
    %c0_122 = arith.constant 0 : index
    %377 = vector.load %arg8[%c0_121, %c0_122] : memref<8x2xf32, #tpu.memory_space<vmem>>, vector<8x2xf32>
    tpu.vector_store %arg8[%c0_121, %c0_122], %376 {strides = array<i32>} : memref<8x2xf32, #tpu.memory_space<vmem>>, vector<8x2xf32>,
    return
  }
}

</mosaic_0001>

<llo_original>
// kernel: tpu_custom_call.1
$region0: #{tpu_custom_call.1}
  #allocation0 [shape = 'u32[]', space=smem, size = 0x4, offset = 0x4, fixed_abs, tag = 'smem constant byte address 0x4 - core index']
  #allocation1 [shape = 'u32[72,128]{1,0:T(1,128)}', space=vmem, size = 0x9000, scoped, tag = 'internal scratch']
  %s0 = inlined_call_operand.vmem [shape: f32[8,12], index: 0, kind: input, shape index: {}]
  %s1 = inlined_call_operand.vmem [shape: f32[8,4], index: 1, kind: input, shape index: {}]
  %s2 = inlined_call_operand.vmem [shape: bf16[12,512], index: 2, kind: input, shape index: {}]
  %s3 = inlined_call_operand.vmem [shape: bf16[4,512], index: 3, kind: input, shape index: {}]
  %s4 = inlined_call_operand.hbm [shape: bf16[2,256,256], index: 4, kind: input, shape index: {}]
  %s5 = inlined_call_operand.hbm [shape: bf16[2,256,256], index: 5, kind: input, shape index: {}]
  %s6 = inlined_call_operand.vmem [shape: bf16[256,2], index: 6, kind: input, shape index: {}]
  %s7 = inlined_call_operand.vmem [shape: f32[19,256], index: 7, kind: input, shape index: {}]
  %s8 = inlined_call_operand.vmem [shape: f32[8,2], index: 8, kind: output, shape index: {}]
  %s9 = sld [smem:[#allocation0]]
  $region50: #{tpu_custom_call.1} parent=0
    _
  %s11 = ssub.s32 1, %s9
  %s12 = scalar_select 0, %s11, %s9
  $region1: #{tpu_custom_call.1} parent=0
    #allocation2 [shape = 'u8[262144]{0}', space=vmem, size = 0x40000, scoped, tag = 'input window, operand 4, single buffered']
    #allocation3 [shape = 's32[1]{0}', space=sflag, size = 0x4, scoped, tag = 'scoped memory for tpu_custom_call.1']
    #allocation4 [shape = 'u8[262144]{0}', space=vmem, size = 0x40000, scoped, tag = 'input window, operand 5, single buffered']
    #allocation5 [shape = 's32[1]{0}', space=sflag, size = 0x4, scoped, tag = 'scoped memory for tpu_custom_call.1']
    %13 = vsyncpa [#allocation3], 0
    %14 = vsyncpa [#allocation5], 0
    // Predicated region
    $region2: #{tpu_custom_call.1} parent=1 // pred_check
      _
    $region3: #{tpu_custom_call.1} parent=1 // pred_check_branch
      %16 = sbr.rel (0) target = $region5
    $region4: #{tpu_custom_call.1} parent=1 // pred_region
      _
    $region5: #{tpu_custom_call.1} parent=1 // pred_fallthru
      _
    // Predicated region
    $region6: #{tpu_custom_call.1} parent=1 // pred_check
      _
    $region7: #{tpu_custom_call.1} parent=1 // pred_check_branch
      %18 = sbr.rel (0) target = $region9
    $region8: #{tpu_custom_call.1} parent=1 // pred_region
      _
    $region9: #{tpu_custom_call.1} parent=1 // pred_fallthru
      _
    // Predicated region
    $region10: #{tpu_custom_call.1} parent=1 // pred_check
      _
    $region11: #{tpu_custom_call.1} parent=1 // pred_check_branch
      %20 = sbr.rel (0) target = $region13
    $region12: #{tpu_custom_call.1} parent=1 // pred_region
      _
    $region13: #{tpu_custom_call.1} parent=1 // pred_fallthru
      _
    // Predicated region
    $region14: #{tpu_custom_call.1} parent=1 // pred_check
      _
    $region15: #{tpu_custom_call.1} parent=1 // pred_check_branch
      %22 = sbr.rel (0) target = $region17
    $region16: #{tpu_custom_call.1} parent=1 // pred_region
      _
    $region17: #{tpu_custom_call.1} parent=1 // pred_fallthru
      _
    // Predicated region
    $region18: #{tpu_custom_call.1} parent=1 // pred_check
      _
    $region19: #{tpu_custom_call.1} parent=1 // pred_check_branch
      %24 = sbr.rel (0) target = $region21
    $region20: #{tpu_custom_call.1} parent=1 // pred_region
      %26 = vsyncadd [#allocation3], 0
      %s27 = sshll.u32 %s4, 4
      %s28 = int_to_ptr.hbm [resolvable:$true] %s27
      %s29 = sshll.u32 [#allocation2], 4
      %s30 = int_to_ptr.vmem [resolvable:$true] %s29
      %35 = dma.hbm_to_vmem [thread:$0]  %s28, 8192, %s30, [#allocation3], 128, 128, 8
    $region21: #{tpu_custom_call.1} parent=1 // pred_fallthru
      _
    // Predicated region
    $region22: #{tpu_custom_call.1} parent=1 // pred_check
      _
    $region23: #{tpu_custom_call.1} parent=1 // pred_check_branch
      %37 = sbr.rel (0) target = $region25
    $region24: #{tpu_custom_call.1} parent=1 // pred_region
      %39 = vsyncadd [#allocation5], 0
      %s40 = sshll.u32 %s5, 4
      %s41 = int_to_ptr.hbm [resolvable:$true] %s40
      %s42 = sshll.u32 [#allocation4], 4
      %s43 = int_to_ptr.vmem [resolvable:$true] %s42
      %48 = dma.hbm_to_vmem [thread:$0]  %s41, 8192, %s43, [#allocation5], 128, 128, 8
    $region25: #{tpu_custom_call.1} parent=1 // pred_fallthru
      _
    // Predicated region
    $region26: #{tpu_custom_call.1} parent=1 // pred_check
      _
    $region27: #{tpu_custom_call.1} parent=1 // pred_check_branch
      %50 = sbr.rel (0) target = $region29
    $region28: #{tpu_custom_call.1} parent=1 // pred_region
      _
    $region29: #{tpu_custom_call.1} parent=1 // pred_fallthru
      _
    // Predicated region
    $region30: #{tpu_custom_call.1} parent=1 // pred_check
      _
    $region31: #{tpu_custom_call.1} parent=1 // pred_check_branch
      %52 = sbr.rel (0) target = $region33
    $region32: #{tpu_custom_call.1} parent=1 // pred_region
      _
    $region33: #{tpu_custom_call.1} parent=1 // pred_fallthru
      _
    // Predicated region
    $region34: #{tpu_custom_call.1} parent=1 // pred_check
      _
    $region35: #{tpu_custom_call.1} parent=1 // pred_check_branch
      %54 = sbr.rel (0) target = $region37
    $region36: #{tpu_custom_call.1} parent=1 // pred_region
      %56 = dma.done [#allocation3], 8192
    $region37: #{tpu_custom_call.1} parent=1 // pred_fallthru
      _
    // Predicated region
    $region38: #{tpu_custom_call.1} parent=1 // pred_check
      _
    $region39: #{tpu_custom_call.1} parent=1 // pred_check_branch
      %58 = sbr.rel (0) target = $region41
    $region40: #{tpu_custom_call.1} parent=1 // pred_region
      %60 = dma.done [#allocation5], 8192
    $region41: #{tpu_custom_call.1} parent=1 // pred_fallthru
      _
    %v62 = vld [vmem:[%s0] sm:$0xff]
    %v63 = vpack.c.bf16 %v62, %v62
    %v64 = vld [vmem:[%s1] sm:$0xff]
    %v65 = vpack.c.bf16 %v64, %v64
    %v66 = vld [vmem:[%s7] sm:$0xff]
    %v67 = vld [vmem:[%s7 + $0x8] sm:$0xff]
    %v68 = vld [vmem:[%s7 + $0x10] sm:$0xff]
    %v69 = vld [vmem:[%s7 + $0x18] sm:$0xff]
    %v70 = vld [vmem:[%s7 + $0x20] sm:$0x7]
    %v71 = vld [vmem:[%s7 + $0x28] sm:$0x7]
    %v72 = vld [vmem:[%s2] sm:$0xff]
    %v73 = vld [vmem:[%s2 + $0x8] sm:$0xff]
    %v74 = vld [vmem:[%s2 + $0x10] sm:$0x33]
    %v75 = vld [vmem:[%s2 + $0x18] sm:$0x33]
    %v76 = vld [vmem:[%s3] sm:$0xff]
    %78 = vst [vmem:[#allocation1] ss:$4 sm:$0xff] %v76
    %v79 = vld.sshfl [vmem:[#allocation1] sm:$0xff pattern:$0x73625140]
    %v80 = vld.sshfl [vmem:[#allocation1 + $0x8] sm:$0xff pattern:$0x73625140]
    %v81 = vld.sshfl [vmem:[#allocation1 + $0x10] sm:$0xff pattern:$0x73625140]
    %v82 = vld.sshfl [vmem:[#allocation1 + $0x18] sm:$0xff pattern:$0x73625140]
    %vm83 = vcmask 31744
    %v85 = vsel %vm83, %v65, 0
    %vm87 = vcmask 1041408
    %v88 = vsel %vm87, %v79, 0
    %v90 = vsel %vm87, %v80, 0
    %v92 = vsel %vm87, %v81, 0
    %v94 = vsel %vm87, %v82, 0
    %96 = vmatpush.bf16.msra.mxu0 0
    %97 = vmatpush.bf16.msra.mxu0 0
    %98 = vmatpush.bf16.msra.mxu0 0
    %99 = vmatpush.bf16.msra.mxu0 0
    %100 = vmatpush.bf16.msra.mxu0 0
    %101 = vmatpush.bf16.msra.mxu0 0
    %102 = vmatpush.bf16.msra.mxu0 0
    %103 = vmatpush.bf16.msra.mxu0 %v88
    %104 = vmatmul.bf16.gmra.mxu0 %v85
    %v105 = vpop.f32.mrf.mxu0
    %v106 = vadd.f32 0.0, %v105
    %v107 = vpop.f32.mrf.mxu0
    %108 = vdwg.mxu0
    %109 = vmatpush.bf16.msra.mxu0 0
    %110 = vmatpush.bf16.msra.mxu0 0
    %111 = vmatpush.bf16.msra.mxu0 0
    %112 = vmatpush.bf16.msra.mxu0 0
    %113 = vmatpush.bf16.msra.mxu0 0
    %114 = vmatpush.bf16.msra.mxu0 0
    %115 = vmatpush.bf16.msra.mxu0 0
    %116 = vmatpush.bf16.msra.mxu0 %v90
    %117 = vmatmul.bf16.gmra.mxu0 %v85
    %v118 = vpop.f32.mrf.mxu0
    %v119 = vadd.f32 0.0, %v118
    %v120 = vpop.f32.mrf.mxu0
    %121 = vdwg.mxu0
    %122 = vmatpush.bf16.msra.mxu0 0
    %123 = vmatpush.bf16.msra.mxu0 0
    %124 = vmatpush.bf16.msra.mxu0 0
    %125 = vmatpush.bf16.msra.mxu0 0
    %126 = vmatpush.bf16.msra.mxu0 0
    %127 = vmatpush.bf16.msra.mxu0 0
    %128 = vmatpush.bf16.msra.mxu0 0
    %129 = vmatpush.bf16.msra.mxu0 %v92
    %130 = vmatmul.bf16.gmra.mxu0 %v85
    %v131 = vpop.f32.mrf.mxu0
    %v132 = vadd.f32 0.0, %v131
    %v133 = vpop.f32.mrf.mxu0
    %134 = vdwg.mxu0
    %135 = vmatpush.bf16.msra.mxu0 0
    %136 = vmatpush.bf16.msra.mxu0 0
    %137 = vmatpush.bf16.msra.mxu0 0
    %138 = vmatpush.bf16.msra.mxu0 0
    %139 = vmatpush.bf16.msra.mxu0 0
    %140 = vmatpush.bf16.msra.mxu0 0
    %141 = vmatpush.bf16.msra.mxu0 0
    %142 = vmatpush.bf16.msra.mxu0 %v94
    %143 = vmatmul.bf16.gmra.mxu0 %v85
    %v144 = vpop.f32.mrf.mxu0
    %v145 = vadd.f32 0.0, %v144
    %v146 = vpop.f32.mrf.mxu0
    %147 = vdwg.mxu0
    %v152 = vunpack.c.l.b16 %v72
    %v153 = vunpack.c.h.b16 %v72
    %v154 = vunpack.c.l.b16 %v73
    %v155 = vunpack.c.h.b16 %v73
    %v156 = vunpack.c.l.b16 %v74
    %v157 = vunpack.c.h.b16 %v74
    %v158 = vunpack.c.l.b16 %v75
    %v159 = vunpack.c.h.b16 %v75
    %v160 = vpack.c.b16 %v156, %v152
    %v161 = vpack.c.b16 %v157, %v153
    %v162 = vpack.c.b16 %v158, %v154
    %v163 = vpack.c.b16 %v159, %v155
    %vm164 = vcmask 97280
    %v166 = vsel %vm164, %v63, 0
    %vm168 = vcmask 1045504
    %v170 = vsel %vm168, %v160, 0
    %v173 = vsel %vm168, %v161, 0
    %v176 = vsel %vm168, %v162, 0
    %v179 = vsel %vm168, %v163, 0
    %181 = vmatpush.bf16.msra.mxu0 0
    %182 = vmatpush.bf16.msra.mxu0 0
    %183 = vmatpush.bf16.msra.mxu0 0
    %184 = vmatpush.bf16.msra.mxu0 0
    %185 = vmatpush.bf16.msra.mxu0 0
    %186 = vmatpush.bf16.msra.mxu0 0
    %187 = vmatpush.bf16.msra.mxu0 0
    %188 = vmatpush.bf16.msra.mxu0 %v170
    %189 = vmatmul.bf16.gmra.mxu0 %v166
    %v190 = vpop.f32.mrf.mxu0
    %v191 = vadd.f32 %v106, %v190
    %v192 = vpop.f32.mrf.mxu0
    %193 = vdwg.mxu0
    %194 = vmatpush.bf16.msra.mxu0 0
    %195 = vmatpush.bf16.msra.mxu0 0
    %196 = vmatpush.bf16.msra.mxu0 0
    %197 = vmatpush.bf16.msra.mxu0 0
    %198 = vmatpush.bf16.msra.mxu0 0
    %199 = vmatpush.bf16.msra.mxu0 0
    %200 = vmatpush.bf16.msra.mxu0 0
    %201 = vmatpush.bf16.msra.mxu0 %v173
    %202 = vmatmul.bf16.gmra.mxu0 %v166
    %v203 = vpop.f32.mrf.mxu0
    %v204 = vadd.f32 %v119, %v203
    %v205 = vpop.f32.mrf.mxu0
    %206 = vdwg.mxu0
    %207 = vmatpush.bf16.msra.mxu0 0
    %208 = vmatpush.bf16.msra.mxu0 0
    %209 = vmatpush.bf16.msra.mxu0 0
    %210 = vmatpush.bf16.msra.mxu0 0
    %211 = vmatpush.bf16.msra.mxu0 0
    %212 = vmatpush.bf16.msra.mxu0 0
    %213 = vmatpush.bf16.msra.mxu0 0
    %214 = vmatpush.bf16.msra.mxu0 %v176
    %215 = vmatmul.bf16.gmra.mxu0 %v166
    %v216 = vpop.f32.mrf.mxu0
    %v217 = vadd.f32 %v132, %v216
    %v218 = vpop.f32.mrf.mxu0
    %219 = vdwg.mxu0
    %220 = vmatpush.bf16.msra.mxu0 0
    %221 = vmatpush.bf16.msra.mxu0 0
    %222 = vmatpush.bf16.msra.mxu0 0
    %223 = vmatpush.bf16.msra.mxu0 0
    %224 = vmatpush.bf16.msra.mxu0 0
    %225 = vmatpush.bf16.msra.mxu0 0
    %226 = vmatpush.bf16.msra.mxu0 0
    %227 = vmatpush.bf16.msra.mxu0 %v179
    %228 = vmatmul.bf16.gmra.mxu0 %v166
    %v229 = vpop.f32.mrf.mxu0
    %v230 = vadd.f32 %v145, %v229
    %v231 = vpop.f32.mrf.mxu0
    %232 = vdwg.mxu0
    %v233 = vld [vmem:[#allocation2] sm:$0xff]
    %v234 = vld [vmem:[#allocation2 + $0x8] sm:$0xff]
    %v235 = vld [vmem:[#allocation2 + $0x10] sm:$0xff]
    %v236 = vld [vmem:[#allocation2 + $0x18] sm:$0xff]
    %v237 = vld [vmem:[#allocation2 + $0x20] sm:$0xff]
    %v238 = vld [vmem:[#allocation2 + $0x28] sm:$0xff]
    %v239 = vld [vmem:[#allocation2 + $0x30] sm:$0xff]
    %v240 = vld [vmem:[#allocation2 + $0x38] sm:$0xff]
    %v241 = vld [vmem:[#allocation2 + $0x40] sm:$0xff]
    %v242 = vld [vmem:[#allocation2 + $0x48] sm:$0xff]
    %v243 = vld [vmem:[#allocation2 + $0x50] sm:$0xff]
    %v244 = vld [vmem:[#allocation2 + $0x58] sm:$0xff]
    %v245 = vld [vmem:[#allocation2 + $0x60] sm:$0xff]
    %v246 = vld [vmem:[#allocation2 + $0x68] sm:$0xff]
    %v247 = vld [vmem:[#allocation2 + $0x70] sm:$0xff]
    %v248 = vld [vmem:[#allocation2 + $0x78] sm:$0xff]
    %v249 = vld [vmem:[#allocation2 + $0x80] sm:$0xff]
    %v250 = vld [vmem:[#allocation2 + $0x88] sm:$0xff]
    %v251 = vld [vmem:[#allocation2 + $0x90] sm:$0xff]
    %v252 = vld [vmem:[#allocation2 + $0x98] sm:$0xff]
    %v253 = vld [vmem:[#allocation2 + $0xa0] sm:$0xff]
    %v254 = vld [vmem:[#allocation2 + $0xa8] sm:$0xff]
    %v255 = vld [vmem:[#allocation2 + $0xb0] sm:$0xff]
    %v256 = vld [vmem:[#allocation2 + $0xb8] sm:$0xff]
    %v257 = vld [vmem:[#allocation2 + $0xc0] sm:$0xff]
    %v258 = vld [vmem:[#allocation2 + $0xc8] sm:$0xff]
    %v259 = vld [vmem:[#allocation2 + $0xd0] sm:$0xff]
    %v260 = vld [vmem:[#allocation2 + $0xd8] sm:$0xff]
    %v261 = vld [vmem:[#allocation2 + $0xe0] sm:$0xff]
    %v262 = vld [vmem:[#allocation2 + $0xe8] sm:$0xff]
    %v263 = vld [vmem:[#allocation2 + $0xf0] sm:$0xff]
    %v264 = vld [vmem:[#allocation2 + $0xf8] sm:$0xff]
    %v265 = vld [vmem:[#allocation4] sm:$0xff]
    %v266 = vld [vmem:[#allocation4 + $0x8] sm:$0xff]
    %v267 = vld [vmem:[#allocation4 + $0x10] sm:$0xff]
    %v268 = vld [vmem:[#allocation4 + $0x18] sm:$0xff]
    %v269 = vld [vmem:[#allocation4 + $0x20] sm:$0xff]
    %v270 = vld [vmem:[#allocation4 + $0x28] sm:$0xff]
    %v271 = vld [vmem:[#allocation4 + $0x30] sm:$0xff]
    %v272 = vld [vmem:[#allocation4 + $0x38] sm:$0xff]
    %v273 = vld [vmem:[#allocation4 + $0x40] sm:$0xff]
    %v274 = vld [vmem:[#allocation4 + $0x48] sm:$0xff]
    %v275 = vld [vmem:[#allocation4 + $0x50] sm:$0xff]
    %v276 = vld [vmem:[#allocation4 + $0x58] sm:$0xff]
    %v277 = vld [vmem:[#allocation4 + $0x60] sm:$0xff]
    %v278 = vld [vmem:[#allocation4 + $0x68] sm:$0xff]
    %v279 = vld [vmem:[#allocation4 + $0x70] sm:$0xff]
    %v280 = vld [vmem:[#allocation4 + $0x78] sm:$0xff]
    %v281 = vld [vmem:[#allocation4 + $0x80] sm:$0xff]
    %v282 = vld [vmem:[#allocation4 + $0x88] sm:$0xff]
    %v283 = vld [vmem:[#allocation4 + $0x90] sm:$0xff]
    %v284 = vld [vmem:[#allocation4 + $0x98] sm:$0xff]
    %v285 = vld [vmem:[#allocation4 + $0xa0] sm:$0xff]
    %v286 = vld [vmem:[#allocation4 + $0xa8] sm:$0xff]
    %v287 = vld [vmem:[#allocation4 + $0xb0] sm:$0xff]
    %v288 = vld [vmem:[#allocation4 + $0xb8] sm:$0xff]
    %v289 = vld [vmem:[#allocation4 + $0xc0] sm:$0xff]
    %v290 = vld [vmem:[#allocation4 + $0xc8] sm:$0xff]
    %v291 = vld [vmem:[#allocation4 + $0xd0] sm:$0xff]
    %v292 = vld [vmem:[#allocation4 + $0xd8] sm:$0xff]
    %v293 = vld [vmem:[#allocation4 + $0xe0] sm:$0xff]
    %v294 = vld [vmem:[#allocation4 + $0xe8] sm:$0xff]
    %v295 = vld [vmem:[#allocation4 + $0xf0] sm:$0xff]
    %v296 = vld [vmem:[#allocation4 + $0xf8] sm:$0xff]
    %v297 = vperm.slane %v66, 0
    %v298 = vperm.slane %v67, 0
    %v299 = vadd.f32 %v191, %v297
    %v300 = vadd.f32 %v204, %v298
    %v301 = vadd.f32 %v299, %v300
    %302 = vadd.xlane.f32.xlu0 %v301
    %v303 = vpop.xlane.xlu0 %302
    %v304 = vrcp.pop 256.0
    %v305 = vmul.f32 256.0, %v304
    %v306 = vsub.f32 1.0, %v305
    %v307 = vmul.f32 %v304, %v306
    %v308 = vadd.f32 %v304, %v307
    %vm309 = vweird.f32 %v304
    %v310 = vsel %vm309, %v304, %v308
    %v311 = vmul.f32 %v303, %v310
    %v312 = vsub.f32 %v299, %v311
    %v313 = vsub.f32 %v300, %v311
    %v314 = vmul.f32 %v312, %v312
    %v315 = vmul.f32 %v313, %v313
    %v316 = vadd.f32 %v314, %v315
    %317 = vadd.xlane.f32.xlu0 %v316
    %v318 = vpop.xlane.xlu0 %317
    %v319 = vmul.f32 %v318, %v310
    %v320 = vadd.f32 %v319, 1e-05
    %v321 = vrsqrt.pop %v320
    %v322 = vmul.f32 %v321, %v320
    %v323 = vmul.f32 %v322, %v321
    %v324 = vmul.f32 0.5, %v323
    %v325 = vsub.f32 1.5, %v324
    %v326 = vmul.f32 %v321, %v325
    %vm327 = vweird.f32 %v320
    %vm328 = vweird.f32 %v321
    %vm329 = vmor %vm327, %vm328
    %v330 = vsel %vm329, %v321, %v326
    %v331 = vmul.f32 %v312, %v330
    %v332 = vmul.f32 %v313, %v330
    %v333 = vperm.slane %v66, 1
    %v334 = vperm.slane %v67, 1
    %v335 = vmul.f32 %v331, %v333
    %v336 = vmul.f32 %v332, %v334
    %v337 = vperm.slane %v66, 2
    %v338 = vperm.slane %v67, 2
    %v339 = vadd.f32 %v335, %v337
    %v340 = vadd.f32 %v336, %v338
    %v341 = vand.u32 2147483647, %v339
    %v342 = vand.u32 2147483647, %v340
    %v343 = vsub.f32 0.0, %v341
    %v344 = vsub.f32 0.0, %v342
    %v345 = vmul.f32 %v343, 1.442695
    %v346 = vpow.pop %v345
    %v347 = vmul.f32 %v344, 1.442695
    %v348 = vpow.pop %v347
    %v349 = vmul.f32 %v346, %v346
    %v350 = vmul.f32 %v348, %v348
    %vm351 = vcmp.ge.f32.partialorder %v339, 0.0
    %vm352 = vcmp.ge.f32.partialorder %v340, 0.0
    %v353 = vmul.f32 %v346, 2.0
    %v354 = vmul.f32 %v348, 2.0
    %v355 = vadd.f32 %v353, 1.0
    %v356 = vadd.f32 %v354, 1.0
    %v357 = vadd.f32 %v353, %v349
    %v358 = vadd.f32 %v354, %v350
    %v359 = vsel %vm351, %v355, %v357
    %v360 = vsel %vm352, %v356, %v358
    %v361 = vmul.f32 %v349, 2.0
    %v362 = vmul.f32 %v350, 2.0
    %v363 = vadd.f32 %v355, %v361
    %v364 = vadd.f32 %v356, %v362
    %v365 = vadd.f32 %v353, 2.0
    %v366 = vadd.f32 %v354, 2.0
    %v367 = vadd.f32 %v365, %v349
    %v368 = vadd.f32 %v366, %v350
    %v369 = vsel %vm351, %v363, %v367
    %v370 = vsel %vm352, %v364, %v368
    %v371 = vmul.f32 %v339, %v359
    %v372 = vmul.f32 %v340, %v360
    %v373 = vrcp.pop %v369
    %v374 = vrcp.pop %v370
    %v375 = vmul.f32 %v371, %v373
    %v376 = vmul.f32 %v372, %v374
    %v377 = vpack.c.bf16 %v375, %v375
    %v378 = vpack.c.bf16 %v376, %v376
    %v379 = vperm.slane %v66, 3
    %v380 = vperm.slane %v67, 3
    %v413 = vunpack.c.l.b16 %v233
    %v414 = vunpack.c.h.b16 %v233
    %v415 = vunpack.c.l.b16 %v234
    %v416 = vunpack.c.h.b16 %v234
    %v417 = vunpack.c.l.b16 %v235
    %v418 = vunpack.c.h.b16 %v235
    %v419 = vunpack.c.l.b16 %v236
    %v420 = vunpack.c.h.b16 %v236
    %v421 = vunpack.c.l.b16 %v237
    %v422 = vunpack.c.h.b16 %v237
    %v423 = vunpack.c.l.b16 %v238
    %v424 = vunpack.c.h.b16 %v238
    %v425 = vunpack.c.l.b16 %v239
    %v426 = vunpack.c.h.b16 %v239
    %v427 = vunpack.c.l.b16 %v240
    %v428 = vunpack.c.h.b16 %v240
    %v429 = vunpack.c.l.b16 %v241
    %v430 = vunpack.c.h.b16 %v241
    %v431 = vunpack.c.l.b16 %v242
    %v432 = vunpack.c.h.b16 %v242
    %v433 = vunpack.c.l.b16 %v243
    %v434 = vunpack.c.h.b16 %v243
    %v435 = vunpack.c.l.b16 %v244
    %v436 = vunpack.c.h.b16 %v244
    %v437 = vunpack.c.l.b16 %v245
    %v438 = vunpack.c.h.b16 %v245
    %v439 = vunpack.c.l.b16 %v246
    %v440 = vunpack.c.h.b16 %v246
    %v441 = vunpack.c.l.b16 %v247
    %v442 = vunpack.c.h.b16 %v247
    %v443 = vunpack.c.l.b16 %v248
    %v444 = vunpack.c.h.b16 %v248
    %v445 = vunpack.c.l.b16 %v249
    %v446 = vunpack.c.h.b16 %v249
    %v447 = vunpack.c.l.b16 %v250
    %v448 = vunpack.c.h.b16 %v250
    %v449 = vunpack.c.l.b16 %v251
    %v450 = vunpack.c.h.b16 %v251
    %v451 = vunpack.c.l.b16 %v252
    %v452 = vunpack.c.h.b16 %v252
    %v453 = vunpack.c.l.b16 %v253
    %v454 = vunpack.c.h.b16 %v253
    %v455 = vunpack.c.l.b16 %v254
    %v456 = vunpack.c.h.b16 %v254
    %v457 = vunpack.c.l.b16 %v255
    %v458 = vunpack.c.h.b16 %v255
    %v459 = vunpack.c.l.b16 %v256
    %v460 = vunpack.c.h.b16 %v256
    %v461 = vunpack.c.l.b16 %v257
    %v462 = vunpack.c.h.b16 %v257
    %v463 = vunpack.c.l.b16 %v258
    %v464 = vunpack.c.h.b16 %v258
    %v465 = vunpack.c.l.b16 %v259
    %v466 = vunpack.c.h.b16 %v259
    %v467 = vunpack.c.l.b16 %v260
    %v468 = vunpack.c.h.b16 %v260
    %v469 = vunpack.c.l.b16 %v261
    %v470 = vunpack.c.h.b16 %v261
    %v471 = vunpack.c.l.b16 %v262
    %v472 = vunpack.c.h.b16 %v262
    %v473 = vunpack.c.l.b16 %v263
    %v474 = vunpack.c.h.b16 %v263
    %v475 = vunpack.c.l.b16 %v264
    %v476 = vunpack.c.h.b16 %v264
    %v477 = vpack.c.b16 %v415, %v413
    %v478 = vpack.c.b16 %v416, %v414
    %v479 = vpack.c.b16 %v419, %v417
    %v480 = vpack.c.b16 %v420, %v418
    %v481 = vpack.c.b16 %v423, %v421
    %v482 = vpack.c.b16 %v424, %v422
    %v483 = vpack.c.b16 %v427, %v425
    %v484 = vpack.c.b16 %v428, %v426
    %v485 = vpack.c.b16 %v431, %v429
    %v486 = vpack.c.b16 %v432, %v430
    %v487 = vpack.c.b16 %v435, %v433
    %v488 = vpack.c.b16 %v436, %v434
    %v489 = vpack.c.b16 %v439, %v437
    %v490 = vpack.c.b16 %v440, %v438
    %v491 = vpack.c.b16 %v443, %v441
    %v492 = vpack.c.b16 %v444, %v442
    %v493 = vpack.c.b16 %v447, %v445
    %v494 = vpack.c.b16 %v448, %v446
    %v495 = vpack.c.b16 %v451, %v449
    %v496 = vpack.c.b16 %v452, %v450
    %v497 = vpack.c.b16 %v455, %v453
    %v498 = vpack.c.b16 %v456, %v454
    %v499 = vpack.c.b16 %v459, %v457
    %v500 = vpack.c.b16 %v460, %v458
    %v501 = vpack.c.b16 %v463, %v461
    %v502 = vpack.c.b16 %v464, %v462
    %v503 = vpack.c.b16 %v467, %v465
    %v504 = vpack.c.b16 %v468, %v466
    %v505 = vpack.c.b16 %v471, %v469
    %v506 = vpack.c.b16 %v472, %v470
    %v507 = vpack.c.b16 %v475, %v473
    %v508 = vpack.c.b16 %v476, %v474
    %541 = vmatpush.bf16.msra.mxu0 %v491
    %542 = vmatpush.bf16.msra.mxu0 %v489
    %543 = vmatpush.bf16.msra.mxu0 %v487
    %544 = vmatpush.bf16.msra.mxu0 %v485
    %545 = vmatpush.bf16.msra.mxu0 %v483
    %546 = vmatpush.bf16.msra.mxu0 %v481
    %547 = vmatpush.bf16.msra.mxu0 %v479
    %548 = vmatpush.bf16.msra.mxu0 %v477
    %549 = vmatmul.bf16.gmra.mxu0 %v377
    %v550 = vpop.f32.mrf.mxu0
    %v551 = vadd.f32 %v379, %v550
    %v552 = vpop.f32.mrf.mxu0
    %553 = vdwg.mxu0
    %554 = vmatpush.bf16.msra.mxu0 %v507
    %555 = vmatpush.bf16.msra.mxu0 %v505
    %556 = vmatpush.bf16.msra.mxu0 %v503
    %557 = vmatpush.bf16.msra.mxu0 %v501
    %558 = vmatpush.bf16.msra.mxu0 %v499
    %559 = vmatpush.bf16.msra.mxu0 %v497
    %560 = vmatpush.bf16.msra.mxu0 %v495
    %561 = vmatpush.bf16.msra.mxu0 %v493
    %562 = vmatmul.bf16.gmra.mxu0 %v378
    %v563 = vpop.f32.mrf.mxu0
    %v564 = vadd.f32 %v551, %v563
    %v565 = vpop.f32.mrf.mxu0
    %566 = vdwg.mxu0
    %567 = vmatpush.bf16.msra.mxu0 %v492
    %568 = vmatpush.bf16.msra.mxu0 %v490
    %569 = vmatpush.bf16.msra.mxu0 %v488
    %570 = vmatpush.bf16.msra.mxu0 %v486
    %571 = vmatpush.bf16.msra.mxu0 %v484
    %572 = vmatpush.bf16.msra.mxu0 %v482
    %573 = vmatpush.bf16.msra.mxu0 %v480
    %574 = vmatpush.bf16.msra.mxu0 %v478
    %575 = vmatmul.bf16.gmra.mxu0 %v377
    %v576 = vpop.f32.mrf.mxu0
    %v577 = vadd.f32 %v380, %v576
    %v578 = vpop.f32.mrf.mxu0
    %579 = vdwg.mxu0
    %580 = vmatpush.bf16.msra.mxu0 %v508
    %581 = vmatpush.bf16.msra.mxu0 %v506
    %582 = vmatpush.bf16.msra.mxu0 %v504
    %583 = vmatpush.bf16.msra.mxu0 %v502
    %584 = vmatpush.bf16.msra.mxu0 %v500
    %585 = vmatpush.bf16.msra.mxu0 %v498
    %586 = vmatpush.bf16.msra.mxu0 %v496
    %587 = vmatpush.bf16.msra.mxu0 %v494
    %588 = vmatmul.bf16.gmra.mxu0 %v378
    %v589 = vpop.f32.mrf.mxu0
    %v590 = vadd.f32 %v577, %v589
    %v591 = vpop.f32.mrf.mxu0
    %592 = vdwg.mxu0
    %v593 = vadd.f32 %v564, %v590
    %594 = vadd.xlane.f32.xlu0 %v593
    %v595 = vpop.xlane.xlu0 %594
    %v596 = vmul.f32 %v595, %v310
    %v597 = vsub.f32 %v564, %v596
    %v598 = vsub.f32 %v590, %v596
    %v599 = vmul.f32 %v597, %v597
    %v600 = vmul.f32 %v598, %v598
    %v601 = vadd.f32 %v599, %v600
    %602 = vadd.xlane.f32.xlu0 %v601
    %v603 = vpop.xlane.xlu0 %602
    %v604 = vmul.f32 %v603, %v310
    %v605 = vadd.f32 %v604, 1e-05
    %v606 = vrsqrt.pop %v605
    %v607 = vmul.f32 %v606, %v605
    %v608 = vmul.f32 %v607, %v606
    %v609 = vmul.f32 0.5, %v608
    %v610 = vsub.f32 1.5, %v609
    %v611 = vmul.f32 %v606, %v610
    %vm612 = vweird.f32 %v605
    %vm613 = vweird.f32 %v606
    %vm614 = vmor %vm612, %vm613
    %v615 = vsel %vm614, %v606, %v611
    %v616 = vmul.f32 %v597, %v615
    %v617 = vmul.f32 %v598, %v615
    %v618 = vperm.slane %v66, 4
    %v619 = vperm.slane %v67, 4
    %v620 = vmul.f32 %v616, %v618
    %v621 = vmul.f32 %v617, %v619
    %v622 = vperm.slane %v66, 5
    %v623 = vperm.slane %v67, 5
    %v624 = vadd.f32 %v620, %v622
    %v625 = vadd.f32 %v621, %v623
    %v626 = vand.u32 2147483647, %v624
    %v627 = vand.u32 2147483647, %v625
    %v628 = vsub.f32 0.0, %v626
    %v629 = vsub.f32 0.0, %v627
    %v630 = vmul.f32 %v628, 1.442695
    %v631 = vpow.pop %v630
    %v632 = vmul.f32 %v629, 1.442695
    %v633 = vpow.pop %v632
    %v634 = vmul.f32 %v631, %v631
    %v635 = vmul.f32 %v633, %v633
    %vm636 = vcmp.ge.f32.partialorder %v624, 0.0
    %vm637 = vcmp.ge.f32.partialorder %v625, 0.0
    %v638 = vmul.f32 %v631, 2.0
    %v639 = vmul.f32 %v633, 2.0
    %v640 = vadd.f32 %v638, 1.0
    %v641 = vadd.f32 %v639, 1.0
    %v642 = vadd.f32 %v638, %v634
    %v643 = vadd.f32 %v639, %v635
    %v644 = vsel %vm636, %v640, %v642
    %v645 = vsel %vm637, %v641, %v643
    %v646 = vmul.f32 %v634, 2.0
    %v647 = vmul.f32 %v635, 2.0
    %v648 = vadd.f32 %v640, %v646
    %v649 = vadd.f32 %v641, %v647
    %v650 = vadd.f32 %v638, 2.0
    %v651 = vadd.f32 %v639, 2.0
    %v652 = vadd.f32 %v650, %v634
    %v653 = vadd.f32 %v651, %v635
    %v654 = vsel %vm636, %v648, %v652
    %v655 = vsel %vm637, %v649, %v653
    %v656 = vmul.f32 %v624, %v644
    %v657 = vmul.f32 %v625, %v645
    %v658 = vrcp.pop %v654
    %v659 = vrcp.pop %v655
    %v660 = vmul.f32 %v656, %v658
    %v661 = vmul.f32 %v657, %v659
    %v662 = vpack.c.bf16 %v660, %v660
    %v663 = vpack.c.bf16 %v661, %v661
    %v664 = vperm.slane %v66, 6
    %v665 = vperm.slane %v67, 6
    %v698 = vunpack.c.l.b16 %v265
    %v699 = vunpack.c.h.b16 %v265
    %v700 = vunpack.c.l.b16 %v266
    %v701 = vunpack.c.h.b16 %v266
    %v702 = vunpack.c.l.b16 %v267
    %v703 = vunpack.c.h.b16 %v267
    %v704 = vunpack.c.l.b16 %v268
    %v705 = vunpack.c.h.b16 %v268
    %v706 = vunpack.c.l.b16 %v269
    %v707 = vunpack.c.h.b16 %v269
    %v708 = vunpack.c.l.b16 %v270
    %v709 = vunpack.c.h.b16 %v270
    %v710 = vunpack.c.l.b16 %v271
    %v711 = vunpack.c.h.b16 %v271
    %v712 = vunpack.c.l.b16 %v272
    %v713 = vunpack.c.h.b16 %v272
    %v714 = vunpack.c.l.b16 %v273
    %v715 = vunpack.c.h.b16 %v273
    %v716 = vunpack.c.l.b16 %v274
    %v717 = vunpack.c.h.b16 %v274
    %v718 = vunpack.c.l.b16 %v275
    %v719 = vunpack.c.h.b16 %v275
    %v720 = vunpack.c.l.b16 %v276
    %v721 = vunpack.c.h.b16 %v276
    %v722 = vunpack.c.l.b16 %v277
    %v723 = vunpack.c.h.b16 %v277
    %v724 = vunpack.c.l.b16 %v278
    %v725 = vunpack.c.h.b16 %v278
    %v726 = vunpack.c.l.b16 %v279
    %v727 = vunpack.c.h.b16 %v279
    %v728 = vunpack.c.l.b16 %v280
    %v729 = vunpack.c.h.b16 %v280
    %v730 = vunpack.c.l.b16 %v281
    %v731 = vunpack.c.h.b16 %v281
    %v732 = vunpack.c.l.b16 %v282
    %v733 = vunpack.c.h.b16 %v282
    %v734 = vunpack.c.l.b16 %v283
    %v735 = vunpack.c.h.b16 %v283
    %v736 = vunpack.c.l.b16 %v284
    %v737 = vunpack.c.h.b16 %v284
    %v738 = vunpack.c.l.b16 %v285
    %v739 = vunpack.c.h.b16 %v285
    %v740 = vunpack.c.l.b16 %v286
    %v741 = vunpack.c.h.b16 %v286
    %v742 = vunpack.c.l.b16 %v287
    %v743 = vunpack.c.h.b16 %v287
    %v744 = vunpack.c.l.b16 %v288
    %v745 = vunpack.c.h.b16 %v288
    %v746 = vunpack.c.l.b16 %v289
    %v747 = vunpack.c.h.b16 %v289
    %v748 = vunpack.c.l.b16 %v290
    %v749 = vunpack.c.h.b16 %v290
    %v750 = vunpack.c.l.b16 %v291
    %v751 = vunpack.c.h.b16 %v291
    %v752 = vunpack.c.l.b16 %v292
    %v753 = vunpack.c.h.b16 %v292
    %v754 = vunpack.c.l.b16 %v293
    %v755 = vunpack.c.h.b16 %v293
    %v756 = vunpack.c.l.b16 %v294
    %v757 = vunpack.c.h.b16 %v294
    %v758 = vunpack.c.l.b16 %v295
    %v759 = vunpack.c.h.b16 %v295
    %v760 = vunpack.c.l.b16 %v296
    %v761 = vunpack.c.h.b16 %v296
    %v762 = vpack.c.b16 %v700, %v698
    %v763 = vpack.c.b16 %v701, %v699
    %v764 = vpack.c.b16 %v704, %v702
    %v765 = vpack.c.b16 %v705, %v703
    %v766 = vpack.c.b16 %v708, %v706
    %v767 = vpack.c.b16 %v709, %v707
    %v768 = vpack.c.b16 %v712, %v710
    %v769 = vpack.c.b16 %v713, %v711
    %v770 = vpack.c.b16 %v716, %v714
    %v771 = vpack.c.b16 %v717, %v715
    %v772 = vpack.c.b16 %v720, %v718
    %v773 = vpack.c.b16 %v721, %v719
    %v774 = vpack.c.b16 %v724, %v722
    %v775 = vpack.c.b16 %v725, %v723
    %v776 = vpack.c.b16 %v728, %v726
    %v777 = vpack.c.b16 %v729, %v727
    %v778 = vpack.c.b16 %v732, %v730
    %v779 = vpack.c.b16 %v733, %v731
    %v780 = vpack.c.b16 %v736, %v734
    %v781 = vpack.c.b16 %v737, %v735
    %v782 = vpack.c.b16 %v740, %v738
    %v783 = vpack.c.b16 %v741, %v739
    %v784 = vpack.c.b16 %v744, %v742
    %v785 = vpack.c.b16 %v745, %v743
    %v786 = vpack.c.b16 %v748, %v746
    %v787 = vpack.c.b16 %v749, %v747
    %v788 = vpack.c.b16 %v752, %v750
    %v789 = vpack.c.b16 %v753, %v751
    %v790 = vpack.c.b16 %v756, %v754
    %v791 = vpack.c.b16 %v757, %v755
    %v792 = vpack.c.b16 %v760, %v758
    %v793 = vpack.c.b16 %v761, %v759
    %826 = vmatpush.bf16.msra.mxu0 %v776
    %827 = vmatpush.bf16.msra.mxu0 %v774
    %828 = vmatpush.bf16.msra.mxu0 %v772
    %829 = vmatpush.bf16.msra.mxu0 %v770
    %830 = vmatpush.bf16.msra.mxu0 %v768
    %831 = vmatpush.bf16.msra.mxu0 %v766
    %832 = vmatpush.bf16.msra.mxu0 %v764
    %833 = vmatpush.bf16.msra.mxu0 %v762
    %834 = vmatmul.bf16.gmra.mxu0 %v662
    %v835 = vpop.f32.mrf.mxu0
    %v836 = vadd.f32 %v664, %v835
    %v837 = vpop.f32.mrf.mxu0
    %838 = vdwg.mxu0
    %839 = vmatpush.bf16.msra.mxu0 %v792
    %840 = vmatpush.bf16.msra.mxu0 %v790
    %841 = vmatpush.bf16.msra.mxu0 %v788
    %842 = vmatpush.bf16.msra.mxu0 %v786
    %843 = vmatpush.bf16.msra.mxu0 %v784
    %844 = vmatpush.bf16.msra.mxu0 %v782
    %845 = vmatpush.bf16.msra.mxu0 %v780
    %846 = vmatpush.bf16.msra.mxu0 %v778
    %847 = vmatmul.bf16.gmra.mxu0 %v663
    %v848 = vpop.f32.mrf.mxu0
    %v849 = vadd.f32 %v836, %v848
    %v850 = vpop.f32.mrf.mxu0
    %851 = vdwg.mxu0
    %852 = vmatpush.bf16.msra.mxu0 %v777
    %853 = vmatpush.bf16.msra.mxu0 %v775
    %854 = vmatpush.bf16.msra.mxu0 %v773
    %855 = vmatpush.bf16.msra.mxu0 %v771
    %856 = vmatpush.bf16.msra.mxu0 %v769
    %857 = vmatpush.bf16.msra.mxu0 %v767
    %858 = vmatpush.bf16.msra.mxu0 %v765
    %859 = vmatpush.bf16.msra.mxu0 %v763
    %860 = vmatmul.bf16.gmra.mxu0 %v662
    %v861 = vpop.f32.mrf.mxu0
    %v862 = vadd.f32 %v665, %v861
    %v863 = vpop.f32.mrf.mxu0
    %864 = vdwg.mxu0
    %865 = vmatpush.bf16.msra.mxu0 %v793
    %866 = vmatpush.bf16.msra.mxu0 %v791
    %867 = vmatpush.bf16.msra.mxu0 %v789
    %868 = vmatpush.bf16.msra.mxu0 %v787
    %869 = vmatpush.bf16.msra.mxu0 %v785
    %870 = vmatpush.bf16.msra.mxu0 %v783
    %871 = vmatpush.bf16.msra.mxu0 %v781
    %872 = vmatpush.bf16.msra.mxu0 %v779
    %873 = vmatmul.bf16.gmra.mxu0 %v663
    %v874 = vpop.f32.mrf.mxu0
    %v875 = vadd.f32 %v862, %v874
    %v876 = vpop.f32.mrf.mxu0
    %877 = vdwg.mxu0
    %v878 = vadd.f32 %v849, %v875
    %879 = vadd.xlane.f32.xlu0 %v878
    %v880 = vpop.xlane.xlu0 %879
    %v881 = vmul.f32 %v880, %v310
    %v882 = vsub.f32 %v849, %v881
    %v883 = vsub.f32 %v875, %v881
    %v884 = vmul.f32 %v882, %v882
    %v885 = vmul.f32 %v883, %v883
    %v886 = vadd.f32 %v884, %v885
    %887 = vadd.xlane.f32.xlu0 %v886
    %v888 = vpop.xlane.xlu0 %887
    %v889 = vmul.f32 %v888, %v310
    %v890 = vadd.f32 %v889, 1e-05
    %v891 = vrsqrt.pop %v890
    %v892 = vmul.f32 %v891, %v890
    %v893 = vmul.f32 %v892, %v891
    %v894 = vmul.f32 0.5, %v893
    %v895 = vsub.f32 1.5, %v894
    %v896 = vmul.f32 %v891, %v895
    %vm897 = vweird.f32 %v890
    %vm898 = vweird.f32 %v891
    %vm899 = vmor %vm897, %vm898
    %v900 = vsel %vm899, %v891, %v896
    %v901 = vmul.f32 %v882, %v900
    %v902 = vmul.f32 %v883, %v900
    %v903 = vperm.slane %v66, 7
    %v904 = vperm.slane %v67, 7
    %v905 = vmul.f32 %v901, %v903
    %v906 = vmul.f32 %v902, %v904
    %v907 = vperm.slane %v68, 0
    %v908 = vperm.slane %v69, 0
    %v909 = vadd.f32 %v905, %v907
    %v910 = vadd.f32 %v906, %v908
    %v911 = vand.u32 2147483647, %v909
    %v912 = vand.u32 2147483647, %v910
    %v913 = vsub.f32 0.0, %v911
    %v914 = vsub.f32 0.0, %v912
    %v915 = vmul.f32 %v913, 1.442695
    %v916 = vpow.pop %v915
    %v917 = vmul.f32 %v914, 1.442695
    %v918 = vpow.pop %v917
    %v919 = vmul.f32 %v916, %v916
    %v920 = vmul.f32 %v918, %v918
    %vm921 = vcmp.ge.f32.partialorder %v909, 0.0
    %vm922 = vcmp.ge.f32.partialorder %v910, 0.0
    %v923 = vmul.f32 %v916, 2.0
    %v924 = vmul.f32 %v918, 2.0
    %v925 = vadd.f32 %v923, 1.0
    %v926 = vadd.f32 %v924, 1.0
    %v927 = vadd.f32 %v923, %v919
    %v928 = vadd.f32 %v924, %v920
    %v929 = vsel %vm921, %v925, %v927
    %v930 = vsel %vm922, %v926, %v928
    %v931 = vmul.f32 %v919, 2.0
    %v932 = vmul.f32 %v920, 2.0
    %v933 = vadd.f32 %v925, %v931
    %v934 = vadd.f32 %v926, %v932
    %v935 = vadd.f32 %v923, 2.0
    %v936 = vadd.f32 %v924, 2.0
    %v937 = vadd.f32 %v935, %v919
    %v938 = vadd.f32 %v936, %v920
    %v939 = vsel %vm921, %v933, %v937
    %v940 = vsel %vm922, %v934, %v938
    %v941 = vmul.f32 %v909, %v929
    %v942 = vmul.f32 %v910, %v930
    %v943 = vrcp.pop %v939
    %v944 = vrcp.pop %v940
    %v945 = vmul.f32 %v941, %v943
    %v946 = vmul.f32 %v942, %v944
    %v947 = vpack.c.bf16 %v945, %v945
    %v948 = vpack.c.bf16 %v946, %v946
    %v949 = vld [vmem:[%s6] sm:$0xf]
    %v950 = vld [vmem:[%s6 + $0x4] sm:$0xf]
    %v951 = vld [vmem:[%s6 + $0x8] sm:$0xf]
    %v952 = vld [vmem:[%s6 + $0xc] sm:$0xf]
    %v953 = vld [vmem:[%s6 + $0x10] sm:$0xf]
    %v954 = vld [vmem:[%s6 + $0x14] sm:$0xf]
    %v955 = vld [vmem:[%s6 + $0x18] sm:$0xf]
    %v956 = vld [vmem:[%s6 + $0x1c] sm:$0xf]
    %v957 = vld [vmem:[%s6 + $0x20] sm:$0xf]
    %v958 = vld [vmem:[%s6 + $0x24] sm:$0xf]
    %v959 = vld [vmem:[%s6 + $0x28] sm:$0xf]
    %v960 = vld [vmem:[%s6 + $0x2c] sm:$0xf]
    %v961 = vld [vmem:[%s6 + $0x30] sm:$0xf]
    %v962 = vld [vmem:[%s6 + $0x34] sm:$0xf]
    %v963 = vld [vmem:[%s6 + $0x38] sm:$0xf]
    %v964 = vld [vmem:[%s6 + $0x3c] sm:$0xf]
    %v965 = vld [vmem:[%s6 + $0x40] sm:$0xf]
    %v966 = vld [vmem:[%s6 + $0x44] sm:$0xf]
    %v967 = vld [vmem:[%s6 + $0x48] sm:$0xf]
    %v968 = vld [vmem:[%s6 + $0x4c] sm:$0xf]
    %v969 = vld [vmem:[%s6 + $0x50] sm:$0xf]
    %v970 = vld [vmem:[%s6 + $0x54] sm:$0xf]
    %v971 = vld [vmem:[%s6 + $0x58] sm:$0xf]
    %v972 = vld [vmem:[%s6 + $0x5c] sm:$0xf]
    %v973 = vld [vmem:[%s6 + $0x60] sm:$0xf]
    %v974 = vld [vmem:[%s6 + $0x64] sm:$0xf]
    %v975 = vld [vmem:[%s6 + $0x68] sm:$0xf]
    %v976 = vld [vmem:[%s6 + $0x6c] sm:$0xf]
    %v977 = vld [vmem:[%s6 + $0x70] sm:$0xf]
    %v978 = vld [vmem:[%s6 + $0x74] sm:$0xf]
    %v979 = vld [vmem:[%s6 + $0x78] sm:$0xf]
    %v980 = vld [vmem:[%s6 + $0x7c] sm:$0xf]
    %v1013 = vunpack.c.l.b16 %v949
    %v1014 = vunpack.c.l.b16 %v950
    %v1015 = vunpack.c.l.b16 %v951
    %v1016 = vunpack.c.l.b16 %v952
    %v1017 = vunpack.c.l.b16 %v953
    %v1018 = vunpack.c.l.b16 %v954
    %v1019 = vunpack.c.l.b16 %v955
    %v1020 = vunpack.c.l.b16 %v956
    %v1021 = vunpack.c.l.b16 %v957
    %v1022 = vunpack.c.l.b16 %v958
    %v1023 = vunpack.c.l.b16 %v959
    %v1024 = vunpack.c.l.b16 %v960
    %v1025 = vunpack.c.l.b16 %v961
    %v1026 = vunpack.c.l.b16 %v962
    %v1027 = vunpack.c.l.b16 %v963
    %v1028 = vunpack.c.l.b16 %v964
    %v1029 = vunpack.c.l.b16 %v965
    %v1030 = vunpack.c.l.b16 %v966
    %v1031 = vunpack.c.l.b16 %v967
    %v1032 = vunpack.c.l.b16 %v968
    %v1033 = vunpack.c.l.b16 %v969
    %v1034 = vunpack.c.l.b16 %v970
    %v1035 = vunpack.c.l.b16 %v971
    %v1036 = vunpack.c.l.b16 %v972
    %v1037 = vunpack.c.l.b16 %v973
    %v1038 = vunpack.c.l.b16 %v974
    %v1039 = vunpack.c.l.b16 %v975
    %v1040 = vunpack.c.l.b16 %v976
    %v1041 = vunpack.c.l.b16 %v977
    %v1042 = vunpack.c.l.b16 %v978
    %v1043 = vunpack.c.l.b16 %v979
    %v1044 = vunpack.c.l.b16 %v980
    %v1045 = vpack.c.b16 %v1014, %v1013
    %v1046 = vpack.c.b16 %v1016, %v1015
    %v1047 = vpack.c.b16 %v1018, %v1017
    %v1048 = vpack.c.b16 %v1020, %v1019
    %v1049 = vpack.c.b16 %v1022, %v1021
    %v1050 = vpack.c.b16 %v1024, %v1023
    %v1051 = vpack.c.b16 %v1026, %v1025
    %v1052 = vpack.c.b16 %v1028, %v1027
    %v1053 = vpack.c.b16 %v1030, %v1029
    %v1054 = vpack.c.b16 %v1032, %v1031
    %v1055 = vpack.c.b16 %v1034, %v1033
    %v1056 = vpack.c.b16 %v1036, %v1035
    %v1057 = vpack.c.b16 %v1038, %v1037
    %v1058 = vpack.c.b16 %v1040, %v1039
    %v1059 = vpack.c.b16 %v1042, %v1041
    %v1060 = vpack.c.b16 %v1044, %v1043
    %1077 = vmatpush.bf16.msra.mxu0 %v1052
    %1078 = vmatpush.bf16.msra.mxu0 %v1051
    %1079 = vmatpush.bf16.msra.mxu0 %v1050
    %1080 = vmatpush.bf16.msra.mxu0 %v1049
    %1081 = vmatpush.bf16.msra.mxu0 %v1048
    %1082 = vmatpush.bf16.msra.mxu0 %v1047
    %1083 = vmatpush.bf16.msra.mxu0 %v1046
    %1084 = vmatpush.bf16.msra.mxu0 %v1045
    %1085 = vmatmul.bf16.gmra.mxu0 %v947
    %v1086 = vpop.f32.mrf.mxu0
    %v1087 = vadd.f32 0.0, %v1086
    %v1088 = vpop.f32.mrf.mxu0
    %1089 = vdwg.mxu0
    %1090 = vmatpush.bf16.msra.mxu0 %v1060
    %1091 = vmatpush.bf16.msra.mxu0 %v1059
    %1092 = vmatpush.bf16.msra.mxu0 %v1058
    %1093 = vmatpush.bf16.msra.mxu0 %v1057
    %1094 = vmatpush.bf16.msra.mxu0 %v1056
    %1095 = vmatpush.bf16.msra.mxu0 %v1055
    %1096 = vmatpush.bf16.msra.mxu0 %v1054
    %1097 = vmatpush.bf16.msra.mxu0 %v1053
    %1098 = vmatmul.bf16.gmra.mxu0 %v948
    %v1099 = vpop.f32.mrf.mxu0
    %v1100 = vadd.f32 %v1087, %v1099
    %v1101 = vpop.f32.mrf.mxu0
    %1102 = vdwg.mxu0
    %s1103 = scalar_lea.vmem [#allocation2], 256
    %v1104 = vld [vmem:[%s1103] sm:$0xff]
    %v1105 = vld [vmem:[%s1103 + $0x8] sm:$0xff]
    %v1106 = vld [vmem:[%s1103 + $0x10] sm:$0xff]
    %v1107 = vld [vmem:[%s1103 + $0x18] sm:$0xff]
    %v1108 = vld [vmem:[%s1103 + $0x20] sm:$0xff]
    %v1109 = vld [vmem:[%s1103 + $0x28] sm:$0xff]
    %v1110 = vld [vmem:[%s1103 + $0x30] sm:$0xff]
    %v1111 = vld [vmem:[%s1103 + $0x38] sm:$0xff]
    %v1112 = vld [vmem:[%s1103 + $0x40] sm:$0xff]
    %v1113 = vld [vmem:[%s1103 + $0x48] sm:$0xff]
    %v1114 = vld [vmem:[%s1103 + $0x50] sm:$0xff]
    %v1115 = vld [vmem:[%s1103 + $0x58] sm:$0xff]
    %v1116 = vld [vmem:[%s1103 + $0x60] sm:$0xff]
    %v1117 = vld [vmem:[%s1103 + $0x68] sm:$0xff]
    %v1118 = vld [vmem:[%s1103 + $0x70] sm:$0xff]
    %v1119 = vld [vmem:[%s1103 + $0x78] sm:$0xff]
    %v1120 = vld [vmem:[%s1103 + $0x80] sm:$0xff]
    %v1121 = vld [vmem:[%s1103 + $0x88] sm:$0xff]
    %v1122 = vld [vmem:[%s1103 + $0x90] sm:$0xff]
    %v1123 = vld [vmem:[%s1103 + $0x98] sm:$0xff]
    %v1124 = vld [vmem:[%s1103 + $0xa0] sm:$0xff]
    %v1125 = vld [vmem:[%s1103 + $0xa8] sm:$0xff]
    %v1126 = vld [vmem:[%s1103 + $0xb0] sm:$0xff]
    %v1127 = vld [vmem:[%s1103 + $0xb8] sm:$0xff]
    %v1128 = vld [vmem:[%s1103 + $0xc0] sm:$0xff]
    %v1129 = vld [vmem:[%s1103 + $0xc8] sm:$0xff]
    %v1130 = vld [vmem:[%s1103 + $0xd0] sm:$0xff]
    %v1131 = vld [vmem:[%s1103 + $0xd8] sm:$0xff]
    %v1132 = vld [vmem:[%s1103 + $0xe0] sm:$0xff]
    %v1133 = vld [vmem:[%s1103 + $0xe8] sm:$0xff]
    %v1134 = vld [vmem:[%s1103 + $0xf0] sm:$0xff]
    %v1135 = vld [vmem:[%s1103 + $0xf8] sm:$0xff]
    %s1136 = scalar_lea.vmem [#allocation4], 256
    %v1137 = vld [vmem:[%s1136] sm:$0xff]
    %v1138 = vld [vmem:[%s1136 + $0x8] sm:$0xff]
    %v1139 = vld [vmem:[%s1136 + $0x10] sm:$0xff]
    %v1140 = vld [vmem:[%s1136 + $0x18] sm:$0xff]
    %v1141 = vld [vmem:[%s1136 + $0x20] sm:$0xff]
    %v1142 = vld [vmem:[%s1136 + $0x28] sm:$0xff]
    %v1143 = vld [vmem:[%s1136 + $0x30] sm:$0xff]
    %v1144 = vld [vmem:[%s1136 + $0x38] sm:$0xff]
    %v1145 = vld [vmem:[%s1136 + $0x40] sm:$0xff]
    %v1146 = vld [vmem:[%s1136 + $0x48] sm:$0xff]
    %v1147 = vld [vmem:[%s1136 + $0x50] sm:$0xff]
    %v1148 = vld [vmem:[%s1136 + $0x58] sm:$0xff]
    %v1149 = vld [vmem:[%s1136 + $0x60] sm:$0xff]
    %v1150 = vld [vmem:[%s1136 + $0x68] sm:$0xff]
    %v1151 = vld [vmem:[%s1136 + $0x70] sm:$0xff]
    %v1152 = vld [vmem:[%s1136 + $0x78] sm:$0xff]
    %v1153 = vld [vmem:[%s1136 + $0x80] sm:$0xff]
    %v1154 = vld [vmem:[%s1136 + $0x88] sm:$0xff]
    %v1155 = vld [vmem:[%s1136 + $0x90] sm:$0xff]
    %v1156 = vld [vmem:[%s1136 + $0x98] sm:$0xff]
    %v1157 = vld [vmem:[%s1136 + $0xa0] sm:$0xff]
    %v1158 = vld [vmem:[%s1136 + $0xa8] sm:$0xff]
    %v1159 = vld [vmem:[%s1136 + $0xb0] sm:$0xff]
    %v1160 = vld [vmem:[%s1136 + $0xb8] sm:$0xff]
    %v1161 = vld [vmem:[%s1136 + $0xc0] sm:$0xff]
    %v1162 = vld [vmem:[%s1136 + $0xc8] sm:$0xff]
    %v1163 = vld [vmem:[%s1136 + $0xd0] sm:$0xff]
    %v1164 = vld [vmem:[%s1136 + $0xd8] sm:$0xff]
    %v1165 = vld [vmem:[%s1136 + $0xe0] sm:$0xff]
    %v1166 = vld [vmem:[%s1136 + $0xe8] sm:$0xff]
    %v1167 = vld [vmem:[%s1136 + $0xf0] sm:$0xff]
    %v1168 = vld [vmem:[%s1136 + $0xf8] sm:$0xff]
    %v1169 = vperm.slane %v68, 1
    %v1170 = vperm.slane %v69, 1
    %v1171 = vadd.f32 %v217, %v1169
    %v1172 = vadd.f32 %v230, %v1170
    %v1173 = vadd.f32 %v1171, %v1172
    %1174 = vadd.xlane.f32.xlu0 %v1173
    %v1175 = vpop.xlane.xlu0 %1174
    %v1176 = vmul.f32 %v1175, %v310
    %v1177 = vsub.f32 %v1171, %v1176
    %v1178 = vsub.f32 %v1172, %v1176
    %v1179 = vmul.f32 %v1177, %v1177
    %v1180 = vmul.f32 %v1178, %v1178
    %v1181 = vadd.f32 %v1179, %v1180
    %1182 = vadd.xlane.f32.xlu0 %v1181
    %v1183 = vpop.xlane.xlu0 %1182
    %v1184 = vmul.f32 %v1183, %v310
    %v1185 = vadd.f32 %v1184, 1e-05
    %v1186 = vrsqrt.pop %v1185
    %v1187 = vmul.f32 %v1186, %v1185
    %v1188 = vmul.f32 %v1187, %v1186
    %v1189 = vmul.f32 0.5, %v1188
    %v1190 = vsub.f32 1.5, %v1189
    %v1191 = vmul.f32 %v1186, %v1190
    %vm1192 = vweird.f32 %v1185
    %vm1193 = vweird.f32 %v1186
    %vm1194 = vmor %vm1192, %vm1193
    %v1195 = vsel %vm1194, %v1186, %v1191
    %v1196 = vmul.f32 %v1177, %v1195
    %v1197 = vmul.f32 %v1178, %v1195
    %v1198 = vperm.slane %v68, 2
    %v1199 = vperm.slane %v69, 2
    %v1200 = vmul.f32 %v1196, %v1198
    %v1201 = vmul.f32 %v1197, %v1199
    %v1202 = vperm.slane %v68, 3
    %v1203 = vperm.slane %v69, 3
    %v1204 = vadd.f32 %v1200, %v1202
    %v1205 = vadd.f32 %v1201, %v1203
    %v1206 = vand.u32 2147483647, %v1204
    %v1207 = vand.u32 2147483647, %v1205
    %v1208 = vsub.f32 0.0, %v1206
    %v1209 = vsub.f32 0.0, %v1207
    %v1210 = vmul.f32 %v1208, 1.442695
    %v1211 = vpow.pop %v1210
    %v1212 = vmul.f32 %v1209, 1.442695
    %v1213 = vpow.pop %v1212
    %v1214 = vmul.f32 %v1211, %v1211
    %v1215 = vmul.f32 %v1213, %v1213
    %vm1216 = vcmp.ge.f32.partialorder %v1204, 0.0
    %vm1217 = vcmp.ge.f32.partialorder %v1205, 0.0
    %v1218 = vmul.f32 %v1211, 2.0
    %v1219 = vmul.f32 %v1213, 2.0
    %v1220 = vadd.f32 %v1218, 1.0
    %v1221 = vadd.f32 %v1219, 1.0
    %v1222 = vadd.f32 %v1218, %v1214
    %v1223 = vadd.f32 %v1219, %v1215
    %v1224 = vsel %vm1216, %v1220, %v1222
    %v1225 = vsel %vm1217, %v1221, %v1223
    %v1226 = vmul.f32 %v1214, 2.0
    %v1227 = vmul.f32 %v1215, 2.0
    %v1228 = vadd.f32 %v1220, %v1226
    %v1229 = vadd.f32 %v1221, %v1227
    %v1230 = vadd.f32 %v1218, 2.0
    %v1231 = vadd.f32 %v1219, 2.0
    %v1232 = vadd.f32 %v1230, %v1214
    %v1233 = vadd.f32 %v1231, %v1215
    %v1234 = vsel %vm1216, %v1228, %v1232
    %v1235 = vsel %vm1217, %v1229, %v1233
    %v1236 = vmul.f32 %v1204, %v1224
    %v1237 = vmul.f32 %v1205, %v1225
    %v1238 = vrcp.pop %v1234
    %v1239 = vrcp.pop %v1235
    %v1240 = vmul.f32 %v1236, %v1238
    %v1241 = vmul.f32 %v1237, %v1239
    %v1242 = vpack.c.bf16 %v1240, %v1240
    %v1243 = vpack.c.bf16 %v1241, %v1241
    %v1244 = vperm.slane %v68, 4
    %v1245 = vperm.slane %v69, 4
    %v1278 = vunpack.c.l.b16 %v1104
    %v1279 = vunpack.c.h.b16 %v1104
    %v1280 = vunpack.c.l.b16 %v1105
    %v1281 = vunpack.c.h.b16 %v1105
    %v1282 = vunpack.c.l.b16 %v1106
    %v1283 = vunpack.c.h.b16 %v1106
    %v1284 = vunpack.c.l.b16 %v1107
    %v1285 = vunpack.c.h.b16 %v1107
    %v1286 = vunpack.c.l.b16 %v1108
    %v1287 = vunpack.c.h.b16 %v1108
    %v1288 = vunpack.c.l.b16 %v1109
    %v1289 = vunpack.c.h.b16 %v1109
    %v1290 = vunpack.c.l.b16 %v1110
    %v1291 = vunpack.c.h.b16 %v1110
    %v1292 = vunpack.c.l.b16 %v1111
    %v1293 = vunpack.c.h.b16 %v1111
    %v1294 = vunpack.c.l.b16 %v1112
    %v1295 = vunpack.c.h.b16 %v1112
    %v1296 = vunpack.c.l.b16 %v1113
    %v1297 = vunpack.c.h.b16 %v1113
    %v1298 = vunpack.c.l.b16 %v1114
    %v1299 = vunpack.c.h.b16 %v1114
    %v1300 = vunpack.c.l.b16 %v1115
    %v1301 = vunpack.c.h.b16 %v1115
    %v1302 = vunpack.c.l.b16 %v1116
    %v1303 = vunpack.c.h.b16 %v1116
    %v1304 = vunpack.c.l.b16 %v1117
    %v1305 = vunpack.c.h.b16 %v1117
    %v1306 = vunpack.c.l.b16 %v1118
    %v1307 = vunpack.c.h.b16 %v1118
    %v1308 = vunpack.c.l.b16 %v1119
    %v1309 = vunpack.c.h.b16 %v1119
    %v1310 = vunpack.c.l.b16 %v1120
    %v1311 = vunpack.c.h.b16 %v1120
    %v1312 = vunpack.c.l.b16 %v1121
    %v1313 = vunpack.c.h.b16 %v1121
    %v1314 = vunpack.c.l.b16 %v1122
    %v1315 = vunpack.c.h.b16 %v1122
    %v1316 = vunpack.c.l.b16 %v1123
    %v1317 = vunpack.c.h.b16 %v1123
    %v1318 = vunpack.c.l.b16 %v1124
    %v1319 = vunpack.c.h.b16 %v1124
    %v1320 = vunpack.c.l.b16 %v1125
    %v1321 = vunpack.c.h.b16 %v1125
    %v1322 = vunpack.c.l.b16 %v1126
    %v1323 = vunpack.c.h.b16 %v1126
    %v1324 = vunpack.c.l.b16 %v1127
    %v1325 = vunpack.c.h.b16 %v1127
    %v1326 = vunpack.c.l.b16 %v1128
    %v1327 = vunpack.c.h.b16 %v1128
    %v1328 = vunpack.c.l.b16 %v1129
    %v1329 = vunpack.c.h.b16 %v1129
    %v1330 = vunpack.c.l.b16 %v1130
    %v1331 = vunpack.c.h.b16 %v1130
    %v1332 = vunpack.c.l.b16 %v1131
    %v1333 = vunpack.c.h.b16 %v1131
    %v1334 = vunpack.c.l.b16 %v1132
    %v1335 = vunpack.c.h.b16 %v1132
    %v1336 = vunpack.c.l.b16 %v1133
    %v1337 = vunpack.c.h.b16 %v1133
    %v1338 = vunpack.c.l.b16 %v1134
    %v1339 = vunpack.c.h.b16 %v1134
    %v1340 = vunpack.c.l.b16 %v1135
    %v1341 = vunpack.c.h.b16 %v1135
    %v1342 = vpack.c.b16 %v1280, %v1278
    %v1343 = vpack.c.b16 %v1281, %v1279
    %v1344 = vpack.c.b16 %v1284, %v1282
    %v1345 = vpack.c.b16 %v1285, %v1283
    %v1346 = vpack.c.b16 %v1288, %v1286
    %v1347 = vpack.c.b16 %v1289, %v1287
    %v1348 = vpack.c.b16 %v1292, %v1290
    %v1349 = vpack.c.b16 %v1293, %v1291
    %v1350 = vpack.c.b16 %v1296, %v1294
    %v1351 = vpack.c.b16 %v1297, %v1295
    %v1352 = vpack.c.b16 %v1300, %v1298
    %v1353 = vpack.c.b16 %v1301, %v1299
    %v1354 = vpack.c.b16 %v1304, %v1302
    %v1355 = vpack.c.b16 %v1305, %v1303
    %v1356 = vpack.c.b16 %v1308, %v1306
    %v1357 = vpack.c.b16 %v1309, %v1307
    %v1358 = vpack.c.b16 %v1312, %v1310
    %v1359 = vpack.c.b16 %v1313, %v1311
    %v1360 = vpack.c.b16 %v1316, %v1314
    %v1361 = vpack.c.b16 %v1317, %v1315
    %v1362 = vpack.c.b16 %v1320, %v1318
    %v1363 = vpack.c.b16 %v1321, %v1319
    %v1364 = vpack.c.b16 %v1324, %v1322
    %v1365 = vpack.c.b16 %v1325, %v1323
    %v1366 = vpack.c.b16 %v1328, %v1326
    %v1367 = vpack.c.b16 %v1329, %v1327
    %v1368 = vpack.c.b16 %v1332, %v1330
    %v1369 = vpack.c.b16 %v1333, %v1331
    %v1370 = vpack.c.b16 %v1336, %v1334
    %v1371 = vpack.c.b16 %v1337, %v1335
    %v1372 = vpack.c.b16 %v1340, %v1338
    %v1373 = vpack.c.b16 %v1341, %v1339
    %1406 = vmatpush.bf16.msra.mxu0 %v1356
    %1407 = vmatpush.bf16.msra.mxu0 %v1354
    %1408 = vmatpush.bf16.msra.mxu0 %v1352
    %1409 = vmatpush.bf16.msra.mxu0 %v1350
    %1410 = vmatpush.bf16.msra.mxu0 %v1348
    %1411 = vmatpush.bf16.msra.mxu0 %v1346
    %1412 = vmatpush.bf16.msra.mxu0 %v1344
    %1413 = vmatpush.bf16.msra.mxu0 %v1342
    %1414 = vmatmul.bf16.gmra.mxu0 %v1242
    %v1415 = vpop.f32.mrf.mxu0
    %v1416 = vadd.f32 %v1244, %v1415
    %v1417 = vpop.f32.mrf.mxu0
    %1418 = vdwg.mxu0
    %1419 = vmatpush.bf16.msra.mxu0 %v1372
    %1420 = vmatpush.bf16.msra.mxu0 %v1370
    %1421 = vmatpush.bf16.msra.mxu0 %v1368
    %1422 = vmatpush.bf16.msra.mxu0 %v1366
    %1423 = vmatpush.bf16.msra.mxu0 %v1364
    %1424 = vmatpush.bf16.msra.mxu0 %v1362
    %1425 = vmatpush.bf16.msra.mxu0 %v1360
    %1426 = vmatpush.bf16.msra.mxu0 %v1358
    %1427 = vmatmul.bf16.gmra.mxu0 %v1243
    %v1428 = vpop.f32.mrf.mxu0
    %v1429 = vadd.f32 %v1416, %v1428
    %v1430 = vpop.f32.mrf.mxu0
    %1431 = vdwg.mxu0
    %1432 = vmatpush.bf16.msra.mxu0 %v1357
    %1433 = vmatpush.bf16.msra.mxu0 %v1355
    %1434 = vmatpush.bf16.msra.mxu0 %v1353
    %1435 = vmatpush.bf16.msra.mxu0 %v1351
    %1436 = vmatpush.bf16.msra.mxu0 %v1349
    %1437 = vmatpush.bf16.msra.mxu0 %v1347
    %1438 = vmatpush.bf16.msra.mxu0 %v1345
    %1439 = vmatpush.bf16.msra.mxu0 %v1343
    %1440 = vmatmul.bf16.gmra.mxu0 %v1242
    %v1441 = vpop.f32.mrf.mxu0
    %v1442 = vadd.f32 %v1245, %v1441
    %v1443 = vpop.f32.mrf.mxu0
    %1444 = vdwg.mxu0
    %1445 = vmatpush.bf16.msra.mxu0 %v1373
    %1446 = vmatpush.bf16.msra.mxu0 %v1371
    %1447 = vmatpush.bf16.msra.mxu0 %v1369
    %1448 = vmatpush.bf16.msra.mxu0 %v1367
    %1449 = vmatpush.bf16.msra.mxu0 %v1365
    %1450 = vmatpush.bf16.msra.mxu0 %v1363
    %1451 = vmatpush.bf16.msra.mxu0 %v1361
    %1452 = vmatpush.bf16.msra.mxu0 %v1359
    %1453 = vmatmul.bf16.gmra.mxu0 %v1243
    %v1454 = vpop.f32.mrf.mxu0
    %v1455 = vadd.f32 %v1442, %v1454
    %v1456 = vpop.f32.mrf.mxu0
    %1457 = vdwg.mxu0
    %v1458 = vadd.f32 %v1429, %v1455
    %1459 = vadd.xlane.f32.xlu0 %v1458
    %v1460 = vpop.xlane.xlu0 %1459
    %v1461 = vmul.f32 %v1460, %v310
    %v1462 = vsub.f32 %v1429, %v1461
    %v1463 = vsub.f32 %v1455, %v1461
    %v1464 = vmul.f32 %v1462, %v1462
    %v1465 = vmul.f32 %v1463, %v1463
    %v1466 = vadd.f32 %v1464, %v1465
    %1467 = vadd.xlane.f32.xlu0 %v1466
    %v1468 = vpop.xlane.xlu0 %1467
    %v1469 = vmul.f32 %v1468, %v310
    %v1470 = vadd.f32 %v1469, 1e-05
    %v1471 = vrsqrt.pop %v1470
    %v1472 = vmul.f32 %v1471, %v1470
    %v1473 = vmul.f32 %v1472, %v1471
    %v1474 = vmul.f32 0.5, %v1473
    %v1475 = vsub.f32 1.5, %v1474
    %v1476 = vmul.f32 %v1471, %v1475
    %vm1477 = vweird.f32 %v1470
    %vm1478 = vweird.f32 %v1471
    %vm1479 = vmor %vm1477, %vm1478
    %v1480 = vsel %vm1479, %v1471, %v1476
    %v1481 = vmul.f32 %v1462, %v1480
    %v1482 = vmul.f32 %v1463, %v1480
    %v1483 = vperm.slane %v68, 5
    %v1484 = vperm.slane %v69, 5
    %v1485 = vmul.f32 %v1481, %v1483
    %v1486 = vmul.f32 %v1482, %v1484
    %v1487 = vperm.slane %v68, 6
    %v1488 = vperm.slane %v69, 6
    %v1489 = vadd.f32 %v1485, %v1487
    %v1490 = vadd.f32 %v1486, %v1488
    %v1491 = vand.u32 2147483647, %v1489
    %v1492 = vand.u32 2147483647, %v1490
    %v1493 = vsub.f32 0.0, %v1491
    %v1494 = vsub.f32 0.0, %v1492
    %v1495 = vmul.f32 %v1493, 1.442695
    %v1496 = vpow.pop %v1495
    %v1497 = vmul.f32 %v1494, 1.442695
    %v1498 = vpow.pop %v1497
    %v1499 = vmul.f32 %v1496, %v1496
    %v1500 = vmul.f32 %v1498, %v1498
    %vm1501 = vcmp.ge.f32.partialorder %v1489, 0.0
    %vm1502 = vcmp.ge.f32.partialorder %v1490, 0.0
    %v1503 = vmul.f32 %v1496, 2.0
    %v1504 = vmul.f32 %v1498, 2.0
    %v1505 = vadd.f32 %v1503, 1.0
    %v1506 = vadd.f32 %v1504, 1.0
    %v1507 = vadd.f32 %v1503, %v1499
    %v1508 = vadd.f32 %v1504, %v1500
    %v1509 = vsel %vm1501, %v1505, %v1507
    %v1510 = vsel %vm1502, %v1506, %v1508
    %v1511 = vmul.f32 %v1499, 2.0
    %v1512 = vmul.f32 %v1500, 2.0
    %v1513 = vadd.f32 %v1505, %v1511
    %v1514 = vadd.f32 %v1506, %v1512
    %v1515 = vadd.f32 %v1503, 2.0
    %v1516 = vadd.f32 %v1504, 2.0
    %v1517 = vadd.f32 %v1515, %v1499
    %v1518 = vadd.f32 %v1516, %v1500
    %v1519 = vsel %vm1501, %v1513, %v1517
    %v1520 = vsel %vm1502, %v1514, %v1518
    %v1521 = vmul.f32 %v1489, %v1509
    %v1522 = vmul.f32 %v1490, %v1510
    %v1523 = vrcp.pop %v1519
    %v1524 = vrcp.pop %v1520
    %v1525 = vmul.f32 %v1521, %v1523
    %v1526 = vmul.f32 %v1522, %v1524
    %v1527 = vpack.c.bf16 %v1525, %v1525
    %v1528 = vpack.c.bf16 %v1526, %v1526
    %v1529 = vperm.slane %v68, 7
    %v1530 = vperm.slane %v69, 7
    %v1563 = vunpack.c.l.b16 %v1137
    %v1564 = vunpack.c.h.b16 %v1137
    %v1565 = vunpack.c.l.b16 %v1138
    %v1566 = vunpack.c.h.b16 %v1138
    %v1567 = vunpack.c.l.b16 %v1139
    %v1568 = vunpack.c.h.b16 %v1139
    %v1569 = vunpack.c.l.b16 %v1140
    %v1570 = vunpack.c.h.b16 %v1140
    %v1571 = vunpack.c.l.b16 %v1141
    %v1572 = vunpack.c.h.b16 %v1141
    %v1573 = vunpack.c.l.b16 %v1142
    %v1574 = vunpack.c.h.b16 %v1142
    %v1575 = vunpack.c.l.b16 %v1143
    %v1576 = vunpack.c.h.b16 %v1143
    %v1577 = vunpack.c.l.b16 %v1144
    %v1578 = vunpack.c.h.b16 %v1144
    %v1579 = vunpack.c.l.b16 %v1145
    %v1580 = vunpack.c.h.b16 %v1145
    %v1581 = vunpack.c.l.b16 %v1146
    %v1582 = vunpack.c.h.b16 %v1146
    %v1583 = vunpack.c.l.b16 %v1147
    %v1584 = vunpack.c.h.b16 %v1147
    %v1585 = vunpack.c.l.b16 %v1148
    %v1586 = vunpack.c.h.b16 %v1148
    %v1587 = vunpack.c.l.b16 %v1149
    %v1588 = vunpack.c.h.b16 %v1149
    %v1589 = vunpack.c.l.b16 %v1150
    %v1590 = vunpack.c.h.b16 %v1150
    %v1591 = vunpack.c.l.b16 %v1151
    %v1592 = vunpack.c.h.b16 %v1151
    %v1593 = vunpack.c.l.b16 %v1152
    %v1594 = vunpack.c.h.b16 %v1152
    %v1595 = vunpack.c.l.b16 %v1153
    %v1596 = vunpack.c.h.b16 %v1153
    %v1597 = vunpack.c.l.b16 %v1154
    %v1598 = vunpack.c.h.b16 %v1154
    %v1599 = vunpack.c.l.b16 %v1155
    %v1600 = vunpack.c.h.b16 %v1155
    %v1601 = vunpack.c.l.b16 %v1156
    %v1602 = vunpack.c.h.b16 %v1156
    %v1603 = vunpack.c.l.b16 %v1157
    %v1604 = vunpack.c.h.b16 %v1157
    %v1605 = vunpack.c.l.b16 %v1158
    %v1606 = vunpack.c.h.b16 %v1158
    %v1607 = vunpack.c.l.b16 %v1159
    %v1608 = vunpack.c.h.b16 %v1159
    %v1609 = vunpack.c.l.b16 %v1160
    %v1610 = vunpack.c.h.b16 %v1160
    %v1611 = vunpack.c.l.b16 %v1161
    %v1612 = vunpack.c.h.b16 %v1161
    %v1613 = vunpack.c.l.b16 %v1162
    %v1614 = vunpack.c.h.b16 %v1162
    %v1615 = vunpack.c.l.b16 %v1163
    %v1616 = vunpack.c.h.b16 %v1163
    %v1617 = vunpack.c.l.b16 %v1164
    %v1618 = vunpack.c.h.b16 %v1164
    %v1619 = vunpack.c.l.b16 %v1165
    %v1620 = vunpack.c.h.b16 %v1165
    %v1621 = vunpack.c.l.b16 %v1166
    %v1622 = vunpack.c.h.b16 %v1166
    %v1623 = vunpack.c.l.b16 %v1167
    %v1624 = vunpack.c.h.b16 %v1167
    %v1625 = vunpack.c.l.b16 %v1168
    %v1626 = vunpack.c.h.b16 %v1168
    %v1627 = vpack.c.b16 %v1565, %v1563
    %v1628 = vpack.c.b16 %v1566, %v1564
    %v1629 = vpack.c.b16 %v1569, %v1567
    %v1630 = vpack.c.b16 %v1570, %v1568
    %v1631 = vpack.c.b16 %v1573, %v1571
    %v1632 = vpack.c.b16 %v1574, %v1572
    %v1633 = vpack.c.b16 %v1577, %v1575
    %v1634 = vpack.c.b16 %v1578, %v1576
    %v1635 = vpack.c.b16 %v1581, %v1579
    %v1636 = vpack.c.b16 %v1582, %v1580
    %v1637 = vpack.c.b16 %v1585, %v1583
    %v1638 = vpack.c.b16 %v1586, %v1584
    %v1639 = vpack.c.b16 %v1589, %v1587
    %v1640 = vpack.c.b16 %v1590, %v1588
    %v1641 = vpack.c.b16 %v1593, %v1591
    %v1642 = vpack.c.b16 %v1594, %v1592
    %v1643 = vpack.c.b16 %v1597, %v1595
    %v1644 = vpack.c.b16 %v1598, %v1596
    %v1645 = vpack.c.b16 %v1601, %v1599
    %v1646 = vpack.c.b16 %v1602, %v1600
    %v1647 = vpack.c.b16 %v1605, %v1603
    %v1648 = vpack.c.b16 %v1606, %v1604
    %v1649 = vpack.c.b16 %v1609, %v1607
    %v1650 = vpack.c.b16 %v1610, %v1608
    %v1651 = vpack.c.b16 %v1613, %v1611
    %v1652 = vpack.c.b16 %v1614, %v1612
    %v1653 = vpack.c.b16 %v1617, %v1615
    %v1654 = vpack.c.b16 %v1618, %v1616
    %v1655 = vpack.c.b16 %v1621, %v1619
    %v1656 = vpack.c.b16 %v1622, %v1620
    %v1657 = vpack.c.b16 %v1625, %v1623
    %v1658 = vpack.c.b16 %v1626, %v1624
    %1691 = vmatpush.bf16.msra.mxu0 %v1641
    %1692 = vmatpush.bf16.msra.mxu0 %v1639
    %1693 = vmatpush.bf16.msra.mxu0 %v1637
    %1694 = vmatpush.bf16.msra.mxu0 %v1635
    %1695 = vmatpush.bf16.msra.mxu0 %v1633
    %1696 = vmatpush.bf16.msra.mxu0 %v1631
    %1697 = vmatpush.bf16.msra.mxu0 %v1629
    %1698 = vmatpush.bf16.msra.mxu0 %v1627
    %1699 = vmatmul.bf16.gmra.mxu0 %v1527
    %v1700 = vpop.f32.mrf.mxu0
    %v1701 = vadd.f32 %v1529, %v1700
    %v1702 = vpop.f32.mrf.mxu0
    %1703 = vdwg.mxu0
    %1704 = vmatpush.bf16.msra.mxu0 %v1657
    %1705 = vmatpush.bf16.msra.mxu0 %v1655
    %1706 = vmatpush.bf16.msra.mxu0 %v1653
    %1707 = vmatpush.bf16.msra.mxu0 %v1651
    %1708 = vmatpush.bf16.msra.mxu0 %v1649
    %1709 = vmatpush.bf16.msra.mxu0 %v1647
    %1710 = vmatpush.bf16.msra.mxu0 %v1645
    %1711 = vmatpush.bf16.msra.mxu0 %v1643
    %1712 = vmatmul.bf16.gmra.mxu0 %v1528
    %v1713 = vpop.f32.mrf.mxu0
    %v1714 = vadd.f32 %v1701, %v1713
    %v1715 = vpop.f32.mrf.mxu0
    %1716 = vdwg.mxu0
    %1717 = vmatpush.bf16.msra.mxu0 %v1642
    %1718 = vmatpush.bf16.msra.mxu0 %v1640
    %1719 = vmatpush.bf16.msra.mxu0 %v1638
    %1720 = vmatpush.bf16.msra.mxu0 %v1636
    %1721 = vmatpush.bf16.msra.mxu0 %v1634
    %1722 = vmatpush.bf16.msra.mxu0 %v1632
    %1723 = vmatpush.bf16.msra.mxu0 %v1630
    %1724 = vmatpush.bf16.msra.mxu0 %v1628
    %1725 = vmatmul.bf16.gmra.mxu0 %v1527
    %v1726 = vpop.f32.mrf.mxu0
    %v1727 = vadd.f32 %v1530, %v1726
    %v1728 = vpop.f32.mrf.mxu0
    %1729 = vdwg.mxu0
    %1730 = vmatpush.bf16.msra.mxu0 %v1658
    %1731 = vmatpush.bf16.msra.mxu0 %v1656
    %1732 = vmatpush.bf16.msra.mxu0 %v1654
    %1733 = vmatpush.bf16.msra.mxu0 %v1652
    %1734 = vmatpush.bf16.msra.mxu0 %v1650
    %1735 = vmatpush.bf16.msra.mxu0 %v1648
    %1736 = vmatpush.bf16.msra.mxu0 %v1646
    %1737 = vmatpush.bf16.msra.mxu0 %v1644
    %1738 = vmatmul.bf16.gmra.mxu0 %v1528
    %v1739 = vpop.f32.mrf.mxu0
    %v1740 = vadd.f32 %v1727, %v1739
    %v1741 = vpop.f32.mrf.mxu0
    %1742 = vdwg.mxu0
    %v1743 = vadd.f32 %v1714, %v1740
    %1744 = vadd.xlane.f32.xlu0 %v1743
    %v1745 = vpop.xlane.xlu0 %1744
    %v1746 = vmul.f32 %v1745, %v310
    %v1747 = vsub.f32 %v1714, %v1746
    %v1748 = vsub.f32 %v1740, %v1746
    %v1749 = vmul.f32 %v1747, %v1747
    %v1750 = vmul.f32 %v1748, %v1748
    %v1751 = vadd.f32 %v1749, %v1750
    %1752 = vadd.xlane.f32.xlu0 %v1751
    %v1753 = vpop.xlane.xlu0 %1752
    %v1754 = vmul.f32 %v1753, %v310
    %v1755 = vadd.f32 %v1754, 1e-05
    %v1756 = vrsqrt.pop %v1755
    %v1757 = vmul.f32 %v1756, %v1755
    %v1758 = vmul.f32 %v1757, %v1756
    %v1759 = vmul.f32 0.5, %v1758
    %v1760 = vsub.f32 1.5, %v1759
    %v1761 = vmul.f32 %v1756, %v1760
    %vm1762 = vweird.f32 %v1755
    %vm1763 = vweird.f32 %v1756
    %vm1764 = vmor %vm1762, %vm1763
    %v1765 = vsel %vm1764, %v1756, %v1761
    %v1766 = vmul.f32 %v1747, %v1765
    %v1767 = vmul.f32 %v1748, %v1765
    %v1768 = vperm.slane %v70, 0
    %v1769 = vperm.slane %v71, 0
    %v1770 = vmul.f32 %v1766, %v1768
    %v1771 = vmul.f32 %v1767, %v1769
    %v1772 = vperm.slane %v70, 1
    %v1773 = vperm.slane %v71, 1
    %v1774 = vadd.f32 %v1770, %v1772
    %v1775 = vadd.f32 %v1771, %v1773
    %v1776 = vand.u32 2147483647, %v1774
    %v1777 = vand.u32 2147483647, %v1775
    %v1778 = vsub.f32 0.0, %v1776
    %v1779 = vsub.f32 0.0, %v1777
    %v1780 = vmul.f32 %v1778, 1.442695
    %v1781 = vpow.pop %v1780
    %v1782 = vmul.f32 %v1779, 1.442695
    %v1783 = vpow.pop %v1782
    %v1784 = vmul.f32 %v1781, %v1781
    %v1785 = vmul.f32 %v1783, %v1783
    %vm1786 = vcmp.ge.f32.partialorder %v1774, 0.0
    %vm1787 = vcmp.ge.f32.partialorder %v1775, 0.0
    %v1788 = vmul.f32 %v1781, 2.0
    %v1789 = vmul.f32 %v1783, 2.0
    %v1790 = vadd.f32 %v1788, 1.0
    %v1791 = vadd.f32 %v1789, 1.0
    %v1792 = vadd.f32 %v1788, %v1784
    %v1793 = vadd.f32 %v1789, %v1785
    %v1794 = vsel %vm1786, %v1790, %v1792
    %v1795 = vsel %vm1787, %v1791, %v1793
    %v1796 = vmul.f32 %v1784, 2.0
    %v1797 = vmul.f32 %v1785, 2.0
    %v1798 = vadd.f32 %v1790, %v1796
    %v1799 = vadd.f32 %v1791, %v1797
    %v1800 = vadd.f32 %v1788, 2.0
    %v1801 = vadd.f32 %v1789, 2.0
    %v1802 = vadd.f32 %v1800, %v1784
    %v1803 = vadd.f32 %v1801, %v1785
    %v1804 = vsel %vm1786, %v1798, %v1802
    %v1805 = vsel %vm1787, %v1799, %v1803
    %v1806 = vmul.f32 %v1774, %v1794
    %v1807 = vmul.f32 %v1775, %v1795
    %v1808 = vrcp.pop %v1804
    %v1809 = vrcp.pop %v1805
    %v1810 = vmul.f32 %v1806, %v1808
    %v1811 = vmul.f32 %v1807, %v1809
    %v1812 = vpack.c.bf16 %v1810, %v1810
    %v1813 = vpack.c.bf16 %v1811, %v1811
    %1814 = vmatpush.bf16.msra.mxu0 %v1052
    %1815 = vmatpush.bf16.msra.mxu0 %v1051
    %1816 = vmatpush.bf16.msra.mxu0 %v1050
    %1817 = vmatpush.bf16.msra.mxu0 %v1049
    %1818 = vmatpush.bf16.msra.mxu0 %v1048
    %1819 = vmatpush.bf16.msra.mxu0 %v1047
    %1820 = vmatpush.bf16.msra.mxu0 %v1046
    %1821 = vmatpush.bf16.msra.mxu0 %v1045
    %1822 = vmatmul.bf16.gmra.mxu0 %v1812
    %v1823 = vpop.f32.mrf.mxu0
    %v1824 = vadd.f32 0.0, %v1823
    %v1825 = vpop.f32.mrf.mxu0
    %1826 = vdwg.mxu0
    %1827 = vmatpush.bf16.msra.mxu0 %v1060
    %1828 = vmatpush.bf16.msra.mxu0 %v1059
    %1829 = vmatpush.bf16.msra.mxu0 %v1058
    %1830 = vmatpush.bf16.msra.mxu0 %v1057
    %1831 = vmatpush.bf16.msra.mxu0 %v1056
    %1832 = vmatpush.bf16.msra.mxu0 %v1055
    %1833 = vmatpush.bf16.msra.mxu0 %v1054
    %1834 = vmatpush.bf16.msra.mxu0 %v1053
    %1835 = vmatmul.bf16.gmra.mxu0 %v1813
    %v1836 = vpop.f32.mrf.mxu0
    %v1837 = vadd.f32 %v1824, %v1836
    %v1838 = vpop.f32.mrf.mxu0
    %1839 = vdwg.mxu0
    %v1840 = vlaneseq
    %v1841 = vand.u32 %v1840, 127
    %vm1842 = vcmp.eq.s32.totalorder %v1841, 0
    %v1843 = vsel %vm1842, %v1100, %v1837
    %v1844 = vperm.slane %v70, 2
    %v1845 = vadd.f32 %v1843, %v1844
    %vm1846 = vcmask 15360
    %1847 = vst.msk [vmem:[%s8] sm:$0xff] %vm1846, %v1845
    // Predicated region
    $region42: #{tpu_custom_call.1} parent=1 // pred_check
      _
    $region43: #{tpu_custom_call.1} parent=1 // pred_check_branch
      %1849 = sbr.rel (0) target = $region45
    $region44: #{tpu_custom_call.1} parent=1 // pred_region
      _
    $region45: #{tpu_custom_call.1} parent=1 // pred_fallthru
      _
    // Predicated region
    $region46: #{tpu_custom_call.1} parent=1 // pred_check
      _
    $region47: #{tpu_custom_call.1} parent=1 // pred_check_branch
      %1851 = sbr.rel (0) target = $region49
    $region48: #{tpu_custom_call.1} parent=1 // pred_region
      _
    $region49: #{tpu_custom_call.1} parent=1 // pred_fallthru
      _
    %1852 = vsyncpa [#allocation3], 1
    %1853 = vsyncpa [#allocation5], 1

</llo_original>
